<compile_context>
chip_gen: v7x
topology: tpu7x:2x2x1
jax: 0.10.0
libtpu: 0.0.40
codegen_flags: <defaults>
</compile_context>

<pallas_src>
import math

import jax
import jax.numpy as jnp
from jax.experimental import pallas as pl
from jax.experimental.pallas import tpu as pltpu


def _round_up(x, m):
    return -(-x // m) * m


# --------------------------------------------------------------------------- #
# Kernel: one grid step processes Tb graphs.
#   a_ref : [Tb, K*N, N]  bf16   (rows ordered (k, n) -> k-major)
#   h_ref : [Tb, N, F]    bf16
#   w_ref : [K*F, O]      bf16   (rows ordered (k, f) -> k-major)
#   b_ref : [1, O]        f32
#   o_ref : [Tb, N, O]    f32
# --------------------------------------------------------------------------- #
def _conv_agg_kernel(a_ref, h_ref, w_ref, b_ref, o_ref):
    tb, n, o = o_ref.shape
    f = h_ref.shape[-1]
    kf = w_ref.shape[0]
    kk = kf // f                                     # static K

    # Stage 1: all K hops aggregated in one batched MXU pass, f32 accumulation.
    ah = jnp.einsum('brm,bmf->brf', a_ref[...], h_ref[...],
                    preferred_element_type=jnp.float32)      # [Tb, K*N, F] f32
    ah = ah.astype(jnp.bfloat16)                              # feed MXU in bf16

    # Stage 2: move k from rows to lanes (128-aligned slices + lane concat,
    # both supported/cheap), then ONE fused [Tb*N, K*F] x [K*F, O] contraction.
    # Column order (k-major, f-minor) matches w_ref's row order exactly.
    ah_cat = jnp.concatenate(
        [ah[:, k * n:(k + 1) * n, :] for k in range(kk)], axis=-1)  # [Tb, N, K*F]
    acc = jnp.dot(ah_cat.reshape(tb * n, kf), w_ref[...],
                  preferred_element_type=jnp.float32)               # [Tb*N, O]
    o_ref[...] = (acc + b_ref[...]).reshape(tb, n, o).astype(o_ref.dtype)


def _tpu_vmem_params():
    """Returns (block budget for _choose_tb, vmem_limit_bytes, has 2 TCs)."""
    two_tc = False
    try:
        two_tc = "v7" in jax.devices()[0].device_kind.lower()
    except Exception:
        pass
    vmem_cap = 64 * 1024 * 1024                  # safe fallback (v7x per-TC size)
    try:
        cap = getattr(pltpu.get_tpu_info(), "vmem_capacity_bytes", None)
        if cap:
            vmem_cap = int(cap)
    except Exception:
        pass
    if two_tc:                                   # v7x: per-TensorCore VMEM is 64 MiB
        vmem_cap = min(vmem_cap, 64 * 1024 * 1024)
    vmem_limit = max(32 * 1024 * 1024, (vmem_cap * 3) // 4)   # ~96 MiB v5e/v6e, ~48 MiB v7x
    budget = max(16 * 1024 * 1024, vmem_limit - 8 * 1024 * 1024)
    return budget, vmem_limit, two_tc


def _choose_tb(B, R, N, F, O, KF, budget, two_tc):
    """Largest divisor of B whose per-step VMEM footprint fits `budget`.

    Accounts for double-buffered input/output blocks, the resident W/bias
    blocks (counted x2: Pallas double-buffers even constant-index blocks), and
    the kernel-internal f32/bf16 intermediates (ah, ah_cat, acc).
    On 2-TC chips (v7x) prefer >=2 grid steps when it costs at most 2x in Tb.
    """
    def vmem_need(tb):
        blocks = 2 * (tb * R * N * 2          # A block (bf16), double-buffered
                      + tb * N * F * 2        # H block (bf16)
                      + tb * N * O * 4)       # out block (f32)
        resident = 2 * (KF * O * 2 + O * 4)   # W (bf16) + bias (f32), x2
        internal = (tb * R * F * 4            # ah (f32)
                    + tb * R * F * 2          # ah cast to bf16
                    + tb * R * F * 2          # ah_cat (bf16)
                    + tb * N * O * 4)         # second-matmul accumulator (f32)
        return blocks + resident + internal

    fitting = [c for c in range(1, B + 1) if B % c == 0 and vmem_need(c) <= budget]
    if not fitting:
        # TODO(synk): tile over N rows when even a single graph's block exceeds VMEM.
        return 1
    best = max(fitting)
    if two_tc and B >= 2:
        multi = [c for c in fitting if B // c >= 2]
        if multi and max(multi) * 2 >= best:   # feed both TCs if it costs <= 2x in Tb
            best = max(multi)
    return best


def conv_agg_dense(A, H, W, bias2d):
    """A: [B, K*N, N] bf16, H: [B, N, F] bf16, W: [K*F, O] bf16, bias2d: [1, O] f32
    -> [B, N, O] f32."""
    B, R, N = A.shape
    F = H.shape[-1]
    KF, O = W.shape
    budget, vmem_limit, two_tc = _tpu_vmem_params()
    Tb = _choose_tb(B, R, N, F, O, KF, budget, two_tc)

    cost = pl.CostEstimate(
        flops=2 * B * (R * N * F + N * KF * O),
        transcendentals=0,
        bytes_accessed=(A.size * 2 + H.size * 2 + W.size * 2
                        + bias2d.size * 4 + B * N * O * 4),
    )

    return pl.pallas_call(
        _conv_agg_kernel,
        out_shape=jax.ShapeDtypeStruct((B, N, O), jnp.float32),
        grid_spec=pltpu.PrefetchScalarGridSpec(
            num_scalar_prefetch=0,
            grid=(B // Tb,),
            in_specs=[
                pl.BlockSpec((Tb, R, N), lambda b: (b, 0, 0)),   # A (bf16)
                pl.BlockSpec((Tb, N, F), lambda b: (b, 0, 0)),   # H (bf16)
                pl.BlockSpec((KF, O), lambda b: (0, 0)),         # W  resident (bf16)
                pl.BlockSpec((1, O), lambda b: (0, 0)),          # bias resident (f32)
            ],
            out_specs=pl.BlockSpec((Tb, N, O), lambda b: (b, 0, 0)),
        ),
        compiler_params=pltpu.CompilerParams(
            dimension_semantics=("parallel",),
            vmem_limit_bytes=vmem_limit,
        ),
        cost_estimate=cost,
    )(A, H, W, bias2d)


def conv_agg_forward(h, X, edge_index, node_index, batch_node, batch_edge,
                     num_node, weight, bias):
    """Faithful re-implementation of Conv_agg.forward."""
    B = num_node.shape[0]
    K = weight.shape[0]
    F = h.shape[1]
    O = weight.shape[-1]
    # NOTE: N is concretized (mirrors num_node.max().item() in the PyTorch code);
    # when wrapping in jax.jit, pass N as a static argument instead.
    N = int(jnp.max(num_node))
    N_pad = _round_up(max(N, 1), 128)   # lane/sublane-dense MXU operands
    F_pad = _round_up(F, 128)
    O_pad = _round_up(O, 128)           # lane-dense (unmasked) output stores
    # TODO(synk): for small F/O, pad the fused K*F contraction jointly (instead
    # of per-k) to further cut padding FLOPs/bandwidth.

    local_src = edge_index[1] - edge_index[0]
    local_dst = edge_index[2] - edge_index[0]
    local_node = node_index[1] - node_index[0]

    # sparse -> dense scatter (plain-JAX glue; padding is zeros only, so results
    # for real nodes are unchanged).  Duplicate (b,src,dst) edges overwrite
    # (.set), matching the PyTorch dense-assignment semantics.
    # TODO(synk): for large / sparse graphs replace this O(B*K*N^2) dense A
    # scatter with a scalar-prefetch edge-block gather design; the dense A
    # stream dominates end-to-end time at scale, not the kernel itself.
    # TODO(synk): on v7x, A could be streamed as fp8 (native MXU dtype there)
    # to halve the dominant HBM stream; not drop-in on v5e/v6e.
    A = jnp.zeros((B, K, N_pad, N_pad), jnp.bfloat16)
    A = A.at[batch_edge, :, local_src, local_dst].set(X.astype(jnp.bfloat16))
    A = A.reshape(B, K * N_pad, N_pad)                # k-major rows (wrapper-side)

    h_pad = jnp.pad(h.astype(jnp.bfloat16), ((0, 0), (0, F_pad - F)))
    H = jnp.zeros((B, N_pad, F_pad), jnp.bfloat16)
    H = H.at[batch_node, local_node, :].set(h_pad)

    W = jnp.pad(weight.astype(jnp.float32),
                ((0, 0), (0, F_pad - F), (0, O_pad - O)))
    W = W.reshape(K * F_pad, O_pad).astype(jnp.bfloat16)   # (k, f)-ordered rows
    b2d = jnp.pad(bias.astype(jnp.float32), (0, O_pad - O)).reshape(1, O_pad)

    out_dense = conv_agg_dense(A, H, W, b2d)               # [B, N_pad, O_pad] f32

    # dense -> per-node gather (commutes with the row-wise matmul + bias)
    return out_dense[batch_node, local_node, :O]           # [num_nodes, O]


def _reference(h, X, edge_index, node_index, batch_node, batch_edge,
               num_node, weight, bias):
    """Pure-jnp f32 transcription of the PyTorch forward (for sanity check)."""
    B = num_node.shape[0]
    K = weight.shape[0]
    N = int(jnp.max(num_node))
    local_src = edge_index[1] - edge_index[0]
    local_dst = edge_index[2] - edge_index[0]
    local_node = node_index[1] - node_index[0]
    resx = jnp.zeros((K, B, N, N), jnp.float32)
    resx = resx.at[:, batch_edge, local_src, local_dst].set(X.T)
    resh = jnp.zeros((B, N, h.shape[1]), jnp.float32)
    resh = resh.at[batch_node, local_node, :].set(h)
    res = jnp.einsum('kbnm,bmf->kbnf', resx, resh)
    res = res[:, batch_node, local_node, :]
    res = jnp.einsum('knf,kfo->no', res, weight) + bias
    return res


if __name__ == "__main__":
    key = jax.random.PRNGKey(0)
    k1, k2, k3 = jax.random.split(key, 3)

    # small synthetic graph batch: B=2 graphs, 5 + 4 nodes, K=3, F=8, O=16
    K, F, O = 3, 8, 16
    num_node = jnp.array([5, 4], jnp.int32)
    total_nodes = 9

    offsets = jnp.array([0] * 5 + [5] * 4, jnp.int32)
    node_index = jnp.stack([offsets, jnp.arange(total_nodes, dtype=jnp.int32)])
    batch_node = jnp.array([0] * 5 + [1] * 4, jnp.int32)

    src = jnp.array([0, 1, 2, 3, 4, 5, 6, 7, 8, 0, 2], jnp.int32)  # global node ids
    dst = jnp.array([1, 2, 3, 4, 0, 6, 7, 8, 5, 3, 4], jnp.int32)
    edge_off = jnp.where(src < 5, 0, 5).astype(jnp.int32)
    batch_edge = jnp.where(src < 5, 0, 1).astype(jnp.int32)
    edge_index = jnp.stack([edge_off, src, dst])
    E = src.shape[0]

    h = jax.random.normal(k1, (total_nodes, F), jnp.float32)
    X = jax.random.normal(k2, (E, K), jnp.float32)

    # deterministic parameter init, matching reset_parameters (glorot / zeros)
    stdv = math.sqrt(6.0 / (F + O))
    weight = jax.random.uniform(k3, (K, F, O), jnp.float32, -stdv, stdv)
    bias = jnp.zeros((O,), jnp.float32)

    out = conv_agg_forward(h, X, edge_index, node_index, batch_node, batch_edge,
                           num_node, weight, bias)
    out = jax.block_until_ready(out)

    ref = _reference(h, X, edge_index, node_index, batch_node, batch_edge,
                     num_node, weight, bias)
    assert out.shape == (total_nodes, O)
    # A/H/W and the AH intermediate are bf16 (accumulation is f32) -> ~3 decimal
    # digits of input rounding; tolerance sized accordingly.
    assert jnp.allclose(out, ref, atol=7.5e-2, rtol=7.5e-2)

    print("KERNEL_OK")
</pallas_src>

<mosaic_0001>
module attributes {stable_mosaic.version = 11 : i64} {
  func.func @_conv_agg_kernel(%arg0: i32, %arg1: memref<2x384x128xbf16, #tpu.memory_space<vmem>>, %arg2: memref<2x128x128xbf16, #tpu.memory_space<vmem>>, %arg3: memref<384x128xbf16, #tpu.memory_space<vmem>>, %arg4: memref<1x128xf32, #tpu.memory_space<vmem>>, %arg5: memref<2x128x128xf32, #tpu.memory_space<vmem>>) attributes {dimension_semantics = [#tpu.dimension_semantics<parallel>], iteration_bounds = array<i64: 1>, scalar_prefetch = 0 : i64, scratch_operands = 0 : i64, tpu.core_type = #tpu.core_type<tc>, window_params = [{transform_indices = @transform_0, window_bounds = array<i64: 2, 384, 128>}, {transform_indices = @transform_1, window_bounds = array<i64: 2, 128, 128>}, {pipeline_mode = #tpu.pipeline_mode<synchronous>, transform_indices = @transform_2, window_bounds = array<i64: 384, 128>}, {pipeline_mode = #tpu.pipeline_mode<synchronous>, transform_indices = @transform_3, window_bounds = array<i64: 1, 128>}, {transform_indices = @transform_4, window_bounds = array<i64: 2, 128, 128>}]} {
    %c0 = arith.constant 0 : index
    %c0_0 = arith.constant 0 : index
    %c0_1 = arith.constant 0 : index
    %0 = vector.load %arg1[%c0, %c0_0, %c0_1] : memref<2x384x128xbf16, #tpu.memory_space<vmem>>, vector<2x384x128xbf16>
    %c0_2 = arith.constant 0 : index
    %c0_3 = arith.constant 0 : index
    %c0_4 = arith.constant 0 : index
    %1 = vector.load %arg2[%c0_2, %c0_3, %c0_4] : memref<2x128x128xbf16, #tpu.memory_space<vmem>>, vector<2x128x128xbf16>
    "tpu.trace_start"() <{level = 10 : i32, message = "brm,bmf->brf"}> : () -> ()
    %cst = arith.constant dense<0.000000e+00> : vector<2x384x128xf32>
    %2 = tpu.matmul %0, %1, %cst {dimension_numbers = #tpu.dot_dimension_numbers<[2], [1], [1], [2], [0, 0, 0, 1, 1, 2], [0], [0]>} : vector<2x384x128xbf16>, vector<2x128x128xbf16>, vector<2x384x128xf32> -> vector<2x384x128xf32>
    "tpu.trace_stop"() : () -> ()
    %3 = arith.truncf %2 : vector<2x384x128xf32> to vector<2x384x128xbf16>
    %4 = vector.extract_strided_slice %3 {offsets = [0, 0, 0], sizes = [2, 128, 128], strides = [1, 1, 1]} : vector<2x384x128xbf16> to vector<2x128x128xbf16>
    %5 = vector.extract_strided_slice %3 {offsets = [0, 128, 0], sizes = [2, 128, 128], strides = [1, 1, 1]} : vector<2x384x128xbf16> to vector<2x128x128xbf16>
    %6 = vector.extract_strided_slice %3 {offsets = [0, 256, 0], sizes = [2, 128, 128], strides = [1, 1, 1]} : vector<2x384x128xbf16> to vector<2x128x128xbf16>
    %7 = tpu.concatenate %4, %5, %6 in 2 : vector<2x128x128xbf16>, vector<2x128x128xbf16>, vector<2x128x128xbf16> -> vector<2x128x384xbf16>
    %8 = vector.shape_cast %7 : vector<2x128x384xbf16> to vector<256x384xbf16>
    %c0_5 = arith.constant 0 : index
    %c0_6 = arith.constant 0 : index
    %9 = vector.load %arg3[%c0_5, %c0_6] : memref<384x128xbf16, #tpu.memory_space<vmem>>, vector<384x128xbf16>
    %cst_7 = arith.constant dense<0.000000e+00> : vector<256x128xf32>
    %10 = tpu.matmul %8, %9, %cst_7 {dimension_numbers = #tpu.dot_dimension_numbers<[1], [0], [0], [1], [0, 0, 1, 1], [], []>} : vector<256x384xbf16>, vector<384x128xbf16>, vector<256x128xf32> -> vector<256x128xf32>
    %c0_8 = arith.constant 0 : index
    %c0_9 = arith.constant 0 : index
    %11 = vector.load %arg4[%c0_8, %c0_9] : memref<1x128xf32, #tpu.memory_space<vmem>>, vector<1x128xf32>
    %12 = vector.broadcast %11 : vector<1x128xf32> to vector<256x128xf32>
    %13 = arith.addf %10, %12 : vector<256x128xf32>
    %14 = vector.shape_cast %13 : vector<256x128xf32> to vector<2x128x128xf32>
    %c0_10 = arith.constant 0 : index
    %c0_11 = arith.constant 0 : index
    %c0_12 = arith.constant 0 : index
    %15 = vector.load %arg5[%c0_10, %c0_11, %c0_12] : memref<2x128x128xf32, #tpu.memory_space<vmem>>, vector<2x128x128xf32>
    tpu.vector_store %arg5[%c0_10, %c0_11, %c0_12], %14 {strides = array<i32>} : memref<2x128x128xf32, #tpu.memory_space<vmem>>, vector<2x128x128xf32>,
    return
  }
  func.func @transform_0(%arg0: i32) -> (i32, i32, i32) {
    %c0_i32 = arith.constant 0 : i32
    %c0_i32_0 = arith.constant 0 : i32
    %c0_i32_1 = arith.constant 0 : i32
    return %arg0, %c0_i32, %c0_i32_0 : i32, i32, i32
  }
  func.func @transform_1(%arg0: i32) -> (i32, i32, i32) {
    %c0_i32 = arith.constant 0 : i32
    %c0_i32_0 = arith.constant 0 : i32
    %c0_i32_1 = arith.constant 0 : i32
    return %arg0, %c0_i32, %c0_i32_0 : i32, i32, i32
  }
  func.func @transform_2(%arg0: i32) -> (i32, i32) {
    %c0_i32 = arith.constant 0 : i32
    %c0_i32_0 = arith.constant 0 : i32
    %c0_i32_1 = arith.constant 0 : i32
    return %c0_i32, %c0_i32_0 : i32, i32
  }
  func.func @transform_3(%arg0: i32) -> (i32, i32) {
    %c0_i32 = arith.constant 0 : i32
    %c0_i32_0 = arith.constant 0 : i32
    %c0_i32_1 = arith.constant 0 : i32
    return %c0_i32, %c0_i32_0 : i32, i32
  }
  func.func @transform_4(%arg0: i32) -> (i32, i32, i32) {
    %c0_i32 = arith.constant 0 : i32
    %c0_i32_0 = arith.constant 0 : i32
    %c0_i32_1 = arith.constant 0 : i32
    return %arg0, %c0_i32, %c0_i32_0 : i32, i32, i32
  }
}

</mosaic_0001>

<llo_original>
// kernel: tpu_custom_call.1
$region0: #{tpu_custom_call.1}
  #allocation0 [shape = 'u32[]', space=smem, size = 0x4, offset = 0x4, fixed_abs, tag = 'smem constant byte address 0x4 - core index']
  #allocation1 [shape = 'u32[144,128]{1,0:T(1,128)}', space=vmem, size = 0x12000, scoped, tag = 'internal scratch']
  %s0 = inlined_call_operand.hbm [shape: bf16[2,384,128], index: 0, kind: input, shape index: {}]
  %s1 = inlined_call_operand.hbm [shape: bf16[2,128,128], index: 1, kind: input, shape index: {}]
  %s2 = inlined_call_operand.hbm [shape: bf16[384,128], index: 2, kind: input, shape index: {}]
  %s3 = inlined_call_operand.vmem [shape: f32[1,128], index: 3, kind: input, shape index: {}]
  %s4 = inlined_call_operand.hbm [shape: f32[2,128,128], index: 4, kind: output, shape index: {}]
  %s5 = sld [smem:[#allocation0]]
  $region38: #{tpu_custom_call.1} parent=0
    _
  %s7 = ssub.s32 1, %s5
  %s8 = scalar_select 0, %s7, %s5
  $region1: #{tpu_custom_call.1} parent=0
    #allocation2 [shape = 'u8[196608]{0}', space=vmem, size = 0x30000, scoped, tag = 'input window, operand 0, single buffered']
    #allocation3 [shape = 's32[1]{0}', space=sflag, size = 0x4, scoped, tag = 'scoped memory for tpu_custom_call.1']
    #allocation4 [shape = 's32[1]{0}', space=sflag, size = 0x4, scoped, tag = 'scoped memory for tpu_custom_call.1']
    #allocation5 [shape = 'u8[65536]{0}', space=vmem, size = 0x10000, scoped, tag = 'input window, operand 1, single buffered']
    #allocation6 [shape = 's32[1]{0}', space=sflag, size = 0x4, scoped, tag = 'scoped memory for tpu_custom_call.1']
    #allocation7 [shape = 'u8[98304]{0}', space=vmem, size = 0x18000, scoped, tag = 'input window, operand 2, single buffered']
    #allocation8 [shape = 'u8[131072]{0}', space=vmem, size = 0x20000, scoped, tag = 'output window, operand 0, single buffered']
    %9 = vsyncpa [#allocation3], 0
    %10 = vsyncpa [#allocation6], 0
    %11 = vsyncpa [#allocation4], 0
    // Predicated region
    $region2: #{tpu_custom_call.1} parent=1 // pred_check
      _
    $region3: #{tpu_custom_call.1} parent=1 // pred_check_branch
      %13 = sbr.rel (0) target = $region5
    $region4: #{tpu_custom_call.1} parent=1 // pred_region
      %s15 = ssub.s32 6144, 6144
      %16 = vsyncadd [#allocation3], %s15
      %s17 = sshll.u32 [#allocation2], 4
      %s18 = int_to_ptr.vmem [resolvable:$true] %s17
      %23 = dma.hbm_to_vmem [thread:$0]  %s0, 6144, %s18, [#allocation3], 64, 64, 4
    $region5: #{tpu_custom_call.1} parent=1 // pred_fallthru
      _
    // Predicated region
    $region6: #{tpu_custom_call.1} parent=1 // pred_check
      _
    $region7: #{tpu_custom_call.1} parent=1 // pred_check_branch
      %25 = sbr.rel (0) target = $region9
    $region8: #{tpu_custom_call.1} parent=1 // pred_region
      %s27 = ssub.s32 2048, 2048
      %28 = vsyncadd [#allocation6], %s27
      %s29 = sshll.u32 [#allocation5], 4
      %s30 = int_to_ptr.vmem [resolvable:$true] %s29
      %35 = dma.hbm_to_vmem [thread:$0]  %s1, 2048, %s30, [#allocation6], 64, 64, 4
    $region9: #{tpu_custom_call.1} parent=1 // pred_fallthru
      _
    // Predicated region
    $region10: #{tpu_custom_call.1} parent=1 // pred_check
      _
    $region11: #{tpu_custom_call.1} parent=1 // pred_check_branch
      %37 = sbr.rel (0) target = $region13
    $region12: #{tpu_custom_call.1} parent=1 // pred_region
      %s39 = ssub.s32 3072, 3072
      %40 = vsyncadd [#allocation6], %s39
      %s41 = sshll.u32 [#allocation7], 4
      %s42 = int_to_ptr.vmem [resolvable:$true] %s41
      %47 = dma.hbm_to_vmem [thread:$0]  %s2, 3072, %s42, [#allocation6], 64, 64, 4
    $region13: #{tpu_custom_call.1} parent=1 // pred_fallthru
      _
    // Predicated region
    $region14: #{tpu_custom_call.1} parent=1 // pred_check
      _
    $region15: #{tpu_custom_call.1} parent=1 // pred_check_branch
      %49 = sbr.rel (0) target = $region17
    $region16: #{tpu_custom_call.1} parent=1 // pred_region
      _
    $region17: #{tpu_custom_call.1} parent=1 // pred_fallthru
      _
    // Predicated region
    $region18: #{tpu_custom_call.1} parent=1 // pred_check
      _
    $region19: #{tpu_custom_call.1} parent=1 // pred_check_branch
      %51 = sbr.rel (0) target = $region21
    $region20: #{tpu_custom_call.1} parent=1 // pred_region
      %52 = dma.done [#allocation3], 6144
    $region21: #{tpu_custom_call.1} parent=1 // pred_fallthru
      _
    // Predicated region
    $region22: #{tpu_custom_call.1} parent=1 // pred_check
      _
    $region23: #{tpu_custom_call.1} parent=1 // pred_check_branch
      %54 = sbr.rel (0) target = $region25
    $region24: #{tpu_custom_call.1} parent=1 // pred_region
      %55 = dma.done [#allocation6], 2048
    $region25: #{tpu_custom_call.1} parent=1 // pred_fallthru
      _
    // Predicated region
    $region26: #{tpu_custom_call.1} parent=1 // pred_check
      _
    $region27: #{tpu_custom_call.1} parent=1 // pred_check_branch
      %57 = sbr.rel (0) target = $region29
    $region28: #{tpu_custom_call.1} parent=1 // pred_region
      %58 = dma.done [#allocation6], 3072
    $region29: #{tpu_custom_call.1} parent=1 // pred_fallthru
      _
    %v60 = vld [vmem:[#allocation2] sm:$0xf]
    %v61 = vld [vmem:[#allocation2 + $0x4] sm:$0xf]
    %v62 = vld [vmem:[#allocation2 + $0x8] sm:$0xf]
    %v63 = vld [vmem:[#allocation2 + $0xc] sm:$0xf]
    %v64 = vld [vmem:[#allocation2 + $0x10] sm:$0xf]
    %v65 = vld [vmem:[#allocation2 + $0x14] sm:$0xf]
    %v66 = vld [vmem:[#allocation2 + $0x18] sm:$0xf]
    %v67 = vld [vmem:[#allocation2 + $0x1c] sm:$0xf]
    %v68 = vld [vmem:[#allocation2 + $0x20] sm:$0xf]
    %v69 = vld [vmem:[#allocation2 + $0x24] sm:$0xf]
    %v70 = vld [vmem:[#allocation2 + $0x28] sm:$0xf]
    %v71 = vld [vmem:[#allocation2 + $0x2c] sm:$0xf]
    %v72 = vld [vmem:[#allocation2 + $0x30] sm:$0xf]
    %v73 = vld [vmem:[#allocation2 + $0x34] sm:$0xf]
    %v74 = vld [vmem:[#allocation2 + $0x38] sm:$0xf]
    %v75 = vld [vmem:[#allocation2 + $0x3c] sm:$0xf]
    %v76 = vld [vmem:[#allocation2 + $0x40] sm:$0xf]
    %v77 = vld [vmem:[#allocation2 + $0x44] sm:$0xf]
    %v78 = vld [vmem:[#allocation2 + $0x48] sm:$0xf]
    %v79 = vld [vmem:[#allocation2 + $0x4c] sm:$0xf]
    %v80 = vld [vmem:[#allocation2 + $0x50] sm:$0xf]
    %v81 = vld [vmem:[#allocation2 + $0x54] sm:$0xf]
    %v82 = vld [vmem:[#allocation2 + $0x58] sm:$0xf]
    %v83 = vld [vmem:[#allocation2 + $0x5c] sm:$0xf]
    %v84 = vld [vmem:[#allocation2 + $0x60] sm:$0xf]
    %v85 = vld [vmem:[#allocation2 + $0x64] sm:$0xf]
    %v86 = vld [vmem:[#allocation2 + $0x68] sm:$0xf]
    %v87 = vld [vmem:[#allocation2 + $0x6c] sm:$0xf]
    %v88 = vld [vmem:[#allocation2 + $0x70] sm:$0xf]
    %v89 = vld [vmem:[#allocation2 + $0x74] sm:$0xf]
    %v90 = vld [vmem:[#allocation2 + $0x78] sm:$0xf]
    %v91 = vld [vmem:[#allocation2 + $0x7c] sm:$0xf]
    %v92 = vld [vmem:[#allocation2 + $0x80] sm:$0xf]
    %v93 = vld [vmem:[#allocation2 + $0x84] sm:$0xf]
    %v94 = vld [vmem:[#allocation2 + $0x88] sm:$0xf]
    %v95 = vld [vmem:[#allocation2 + $0x8c] sm:$0xf]
    %v96 = vld [vmem:[#allocation2 + $0x90] sm:$0xf]
    %v97 = vld [vmem:[#allocation2 + $0x94] sm:$0xf]
    %v98 = vld [vmem:[#allocation2 + $0x98] sm:$0xf]
    %v99 = vld [vmem:[#allocation2 + $0x9c] sm:$0xf]
    %v100 = vld [vmem:[#allocation2 + $0xa0] sm:$0xf]
    %v101 = vld [vmem:[#allocation2 + $0xa4] sm:$0xf]
    %v102 = vld [vmem:[#allocation2 + $0xa8] sm:$0xf]
    %v103 = vld [vmem:[#allocation2 + $0xac] sm:$0xf]
    %v104 = vld [vmem:[#allocation2 + $0xb0] sm:$0xf]
    %v105 = vld [vmem:[#allocation2 + $0xb4] sm:$0xf]
    %v106 = vld [vmem:[#allocation2 + $0xb8] sm:$0xf]
    %v107 = vld [vmem:[#allocation2 + $0xbc] sm:$0xf]
    %v108 = vld [vmem:[#allocation2 + $0xc0] sm:$0xf]
    %v109 = vld [vmem:[#allocation2 + $0xc4] sm:$0xf]
    %v110 = vld [vmem:[#allocation2 + $0xc8] sm:$0xf]
    %v111 = vld [vmem:[#allocation2 + $0xcc] sm:$0xf]
    %v112 = vld [vmem:[#allocation2 + $0xd0] sm:$0xf]
    %v113 = vld [vmem:[#allocation2 + $0xd4] sm:$0xf]
    %v114 = vld [vmem:[#allocation2 + $0xd8] sm:$0xf]
    %v115 = vld [vmem:[#allocation2 + $0xdc] sm:$0xf]
    %v116 = vld [vmem:[#allocation2 + $0xe0] sm:$0xf]
    %v117 = vld [vmem:[#allocation2 + $0xe4] sm:$0xf]
    %v118 = vld [vmem:[#allocation2 + $0xe8] sm:$0xf]
    %v119 = vld [vmem:[#allocation2 + $0xec] sm:$0xf]
    %v120 = vld [vmem:[#allocation2 + $0xf0] sm:$0xf]
    %v121 = vld [vmem:[#allocation2 + $0xf4] sm:$0xf]
    %v122 = vld [vmem:[#allocation2 + $0xf8] sm:$0xf]
    %v123 = vld [vmem:[#allocation2 + $0xfc] sm:$0xf]
    %v124 = vld [vmem:[#allocation2 + $0x100] sm:$0xf]
    %v125 = vld [vmem:[#allocation2 + $0x104] sm:$0xf]
    %v126 = vld [vmem:[#allocation2 + $0x108] sm:$0xf]
    %v127 = vld [vmem:[#allocation2 + $0x10c] sm:$0xf]
    %v128 = vld [vmem:[#allocation2 + $0x110] sm:$0xf]
    %v129 = vld [vmem:[#allocation2 + $0x114] sm:$0xf]
    %v130 = vld [vmem:[#allocation2 + $0x118] sm:$0xf]
    %v131 = vld [vmem:[#allocation2 + $0x11c] sm:$0xf]
    %v132 = vld [vmem:[#allocation2 + $0x120] sm:$0xf]
    %v133 = vld [vmem:[#allocation2 + $0x124] sm:$0xf]
    %v134 = vld [vmem:[#allocation2 + $0x128] sm:$0xf]
    %v135 = vld [vmem:[#allocation2 + $0x12c] sm:$0xf]
    %v136 = vld [vmem:[#allocation2 + $0x130] sm:$0xf]
    %v137 = vld [vmem:[#allocation2 + $0x134] sm:$0xf]
    %v138 = vld [vmem:[#allocation2 + $0x138] sm:$0xf]
    %v139 = vld [vmem:[#allocation2 + $0x13c] sm:$0xf]
    %v140 = vld [vmem:[#allocation2 + $0x140] sm:$0xf]
    %v141 = vld [vmem:[#allocation2 + $0x144] sm:$0xf]
    %v142 = vld [vmem:[#allocation2 + $0x148] sm:$0xf]
    %v143 = vld [vmem:[#allocation2 + $0x14c] sm:$0xf]
    %v144 = vld [vmem:[#allocation2 + $0x150] sm:$0xf]
    %v145 = vld [vmem:[#allocation2 + $0x154] sm:$0xf]
    %v146 = vld [vmem:[#allocation2 + $0x158] sm:$0xf]
    %v147 = vld [vmem:[#allocation2 + $0x15c] sm:$0xf]
    %v148 = vld [vmem:[#allocation2 + $0x160] sm:$0xf]
    %v149 = vld [vmem:[#allocation2 + $0x164] sm:$0xf]
    %v150 = vld [vmem:[#allocation2 + $0x168] sm:$0xf]
    %v151 = vld [vmem:[#allocation2 + $0x16c] sm:$0xf]
    %v152 = vld [vmem:[#allocation2 + $0x170] sm:$0xf]
    %v153 = vld [vmem:[#allocation2 + $0x174] sm:$0xf]
    %v154 = vld [vmem:[#allocation2 + $0x178] sm:$0xf]
    %v155 = vld [vmem:[#allocation2 + $0x17c] sm:$0xf]
    %v156 = vld [vmem:[#allocation5] sm:$0xf]
    %v157 = vld [vmem:[#allocation5 + $0x4] sm:$0xf]
    %v158 = vld [vmem:[#allocation5 + $0x8] sm:$0xf]
    %v159 = vld [vmem:[#allocation5 + $0xc] sm:$0xf]
    %v160 = vld [vmem:[#allocation5 + $0x10] sm:$0xf]
    %v161 = vld [vmem:[#allocation5 + $0x14] sm:$0xf]
    %v162 = vld [vmem:[#allocation5 + $0x18] sm:$0xf]
    %v163 = vld [vmem:[#allocation5 + $0x1c] sm:$0xf]
    %v164 = vld [vmem:[#allocation5 + $0x20] sm:$0xf]
    %v165 = vld [vmem:[#allocation5 + $0x24] sm:$0xf]
    %v166 = vld [vmem:[#allocation5 + $0x28] sm:$0xf]
    %v167 = vld [vmem:[#allocation5 + $0x2c] sm:$0xf]
    %v168 = vld [vmem:[#allocation5 + $0x30] sm:$0xf]
    %v169 = vld [vmem:[#allocation5 + $0x34] sm:$0xf]
    %v170 = vld [vmem:[#allocation5 + $0x38] sm:$0xf]
    %v171 = vld [vmem:[#allocation5 + $0x3c] sm:$0xf]
    %v172 = vld [vmem:[#allocation5 + $0x40] sm:$0xf]
    %v173 = vld [vmem:[#allocation5 + $0x44] sm:$0xf]
    %v174 = vld [vmem:[#allocation5 + $0x48] sm:$0xf]
    %v175 = vld [vmem:[#allocation5 + $0x4c] sm:$0xf]
    %v176 = vld [vmem:[#allocation5 + $0x50] sm:$0xf]
    %v177 = vld [vmem:[#allocation5 + $0x54] sm:$0xf]
    %v178 = vld [vmem:[#allocation5 + $0x58] sm:$0xf]
    %v179 = vld [vmem:[#allocation5 + $0x5c] sm:$0xf]
    %v180 = vld [vmem:[#allocation5 + $0x60] sm:$0xf]
    %v181 = vld [vmem:[#allocation5 + $0x64] sm:$0xf]
    %v182 = vld [vmem:[#allocation5 + $0x68] sm:$0xf]
    %v183 = vld [vmem:[#allocation5 + $0x6c] sm:$0xf]
    %v184 = vld [vmem:[#allocation5 + $0x70] sm:$0xf]
    %v185 = vld [vmem:[#allocation5 + $0x74] sm:$0xf]
    %v186 = vld [vmem:[#allocation5 + $0x78] sm:$0xf]
    %v187 = vld [vmem:[#allocation5 + $0x7c] sm:$0xf]
    %v236 = vunpack.c.l.b16 %v60
    %v237 = vunpack.c.l.b16 %v61
    %v238 = vunpack.c.l.b16 %v62
    %v239 = vunpack.c.l.b16 %v63
    %v240 = vunpack.c.l.b16 %v64
    %v241 = vunpack.c.l.b16 %v65
    %v242 = vunpack.c.l.b16 %v66
    %v243 = vunpack.c.l.b16 %v67
    %v244 = vunpack.c.l.b16 %v68
    %v245 = vunpack.c.l.b16 %v69
    %v246 = vunpack.c.l.b16 %v70
    %v247 = vunpack.c.l.b16 %v71
    %v248 = vunpack.c.l.b16 %v72
    %v249 = vunpack.c.l.b16 %v73
    %v250 = vunpack.c.l.b16 %v74
    %v251 = vunpack.c.l.b16 %v75
    %v252 = vunpack.c.l.b16 %v76
    %v253 = vunpack.c.l.b16 %v77
    %v254 = vunpack.c.l.b16 %v78
    %v255 = vunpack.c.l.b16 %v79
    %v256 = vunpack.c.l.b16 %v80
    %v257 = vunpack.c.l.b16 %v81
    %v258 = vunpack.c.l.b16 %v82
    %v259 = vunpack.c.l.b16 %v83
    %v260 = vunpack.c.l.b16 %v84
    %v261 = vunpack.c.l.b16 %v85
    %v262 = vunpack.c.l.b16 %v86
    %v263 = vunpack.c.l.b16 %v87
    %v264 = vunpack.c.l.b16 %v88
    %v265 = vunpack.c.l.b16 %v89
    %v266 = vunpack.c.l.b16 %v90
    %v267 = vunpack.c.l.b16 %v91
    %v268 = vunpack.c.l.b16 %v92
    %v269 = vunpack.c.l.b16 %v93
    %v270 = vunpack.c.l.b16 %v94
    %v271 = vunpack.c.l.b16 %v95
    %v272 = vunpack.c.l.b16 %v96
    %v273 = vunpack.c.l.b16 %v97
    %v274 = vunpack.c.l.b16 %v98
    %v275 = vunpack.c.l.b16 %v99
    %v276 = vunpack.c.l.b16 %v100
    %v277 = vunpack.c.l.b16 %v101
    %v278 = vunpack.c.l.b16 %v102
    %v279 = vunpack.c.l.b16 %v103
    %v280 = vunpack.c.l.b16 %v104
    %v281 = vunpack.c.l.b16 %v105
    %v282 = vunpack.c.l.b16 %v106
    %v283 = vunpack.c.l.b16 %v107
    %v284 = vpack.c.b16 %v237, %v236
    %v285 = vpack.c.b16 %v239, %v238
    %v286 = vpack.c.b16 %v241, %v240
    %v287 = vpack.c.b16 %v243, %v242
    %v288 = vpack.c.b16 %v245, %v244
    %v289 = vpack.c.b16 %v247, %v246
    %v290 = vpack.c.b16 %v249, %v248
    %v291 = vpack.c.b16 %v251, %v250
    %v292 = vpack.c.b16 %v253, %v252
    %v293 = vpack.c.b16 %v255, %v254
    %v294 = vpack.c.b16 %v257, %v256
    %v295 = vpack.c.b16 %v259, %v258
    %v296 = vpack.c.b16 %v261, %v260
    %v297 = vpack.c.b16 %v263, %v262
    %v298 = vpack.c.b16 %v265, %v264
    %v299 = vpack.c.b16 %v267, %v266
    %v300 = vpack.c.b16 %v269, %v268
    %v301 = vpack.c.b16 %v271, %v270
    %v302 = vpack.c.b16 %v273, %v272
    %v303 = vpack.c.b16 %v275, %v274
    %v304 = vpack.c.b16 %v277, %v276
    %v305 = vpack.c.b16 %v279, %v278
    %v306 = vpack.c.b16 %v281, %v280
    %v307 = vpack.c.b16 %v283, %v282
    %v348 = vunpack.c.l.b16 %v156
    %v349 = vunpack.c.l.b16 %v157
    %v350 = vunpack.c.l.b16 %v158
    %v351 = vunpack.c.l.b16 %v159
    %v352 = vunpack.c.l.b16 %v160
    %v353 = vunpack.c.l.b16 %v161
    %v354 = vunpack.c.l.b16 %v162
    %v355 = vunpack.c.l.b16 %v163
    %v356 = vunpack.c.l.b16 %v164
    %v357 = vunpack.c.l.b16 %v165
    %v358 = vunpack.c.l.b16 %v166
    %v359 = vunpack.c.l.b16 %v167
    %v360 = vunpack.c.l.b16 %v168
    %v361 = vunpack.c.l.b16 %v169
    %v362 = vunpack.c.l.b16 %v170
    %v363 = vunpack.c.l.b16 %v171
    %v364 = vpack.c.b16 %v349, %v348
    %v365 = vpack.c.b16 %v351, %v350
    %v366 = vpack.c.b16 %v353, %v352
    %v367 = vpack.c.b16 %v355, %v354
    %v368 = vpack.c.b16 %v357, %v356
    %v369 = vpack.c.b16 %v359, %v358
    %v370 = vpack.c.b16 %v361, %v360
    %v371 = vpack.c.b16 %v363, %v362
    %380 = vmatprep.subr.bf16.mxu0 0
    %381 = vmatpush1.bf16.msra.mxu0 %v364
    %382 = vmatprep.subr.bf16.mxu0 0
    %383 = vmatpush1.bf16.msra.mxu0 %v365
    %384 = vmatprep.subr.bf16.mxu0 0
    %385 = vmatpush1.bf16.msra.mxu0 %v366
    %386 = vmatprep.subr.bf16.mxu0 0
    %387 = vmatpush1.bf16.msra.mxu0 %v367
    %388 = vmatprep.subr.bf16.mxu0 0
    %389 = vmatpush1.bf16.msra.mxu0 %v368
    %390 = vmatprep.subr.bf16.mxu0 0
    %391 = vmatpush1.bf16.msra.mxu0 %v369
    %392 = vmatprep.subr.bf16.mxu0 0
    %393 = vmatpush1.bf16.msra.mxu0 %v370
    %394 = vmatprep.subr.bf16.mxu0 0
    %395 = vmatpush1.bf16.msra.mxu0 %v371
    %396 = vmatprep.subr.bf16.mxu0 0
    %397 = vmatpush1.bf16.msra.mxu0 0
    %398 = vmatprep.subr.bf16.mxu0 0
    %399 = vmatpush1.bf16.msra.mxu0 0
    %400 = vmatprep.subr.bf16.mxu0 0
    %401 = vmatpush1.bf16.msra.mxu0 0
    %402 = vmatprep.subr.bf16.mxu0 0
    %403 = vmatpush1.bf16.msra.mxu0 0
    %404 = vmatprep.subr.bf16.mxu0 0
    %405 = vmatpush1.bf16.msra.mxu0 0
    %406 = vmatprep.subr.bf16.mxu0 0
    %407 = vmatpush1.bf16.msra.mxu0 0
    %408 = vmatprep.subr.bf16.mxu0 0
    %409 = vmatpush1.bf16.msra.mxu0 0
    %410 = vmatprep.subr.bf16.mxu0 0
    %411 = vmatpush1.bf16.msra.mxu0 0
    %412 = vmatprep.mubr.bf16.mxu0 0
    %413 = vmatmul.mubr.bf16.gmra.mrb[0].mxu0 %v284
    %v414 = vpop.f32.mrb[0].mxu0
    %v415 = vadd.f32 0.0, %v414
    %v416 = vpop.f32.mrb[0].mxu0
    %v417 = vpop.f32.mrb[0].mxu0
    %v418 = vadd.f32 0.0, %v417
    %v419 = vpop.f32.mrb[0].mxu0
    %420 = vmatprep.mubr.bf16.mxu0 0
    %421 = vmatmul.mubr.bf16.gmra.mrb[0].mxu0 %v285
    %v422 = vpop.f32.mrb[0].mxu0
    %v423 = vadd.f32 0.0, %v422
    %v424 = vpop.f32.mrb[0].mxu0
    %v425 = vpop.f32.mrb[0].mxu0
    %v426 = vadd.f32 0.0, %v425
    %v427 = vpop.f32.mrb[0].mxu0
    %428 = vmatprep.mubr.bf16.mxu0 0
    %429 = vmatmul.mubr.bf16.gmra.mrb[0].mxu0 %v286
    %v430 = vpop.f32.mrb[0].mxu0
    %v431 = vadd.f32 0.0, %v430
    %v432 = vpop.f32.mrb[0].mxu0
    %v433 = vpop.f32.mrb[0].mxu0
    %v434 = vadd.f32 0.0, %v433
    %v435 = vpop.f32.mrb[0].mxu0
    %436 = vmatprep.mubr.bf16.mxu0 0
    %437 = vmatmul.mubr.bf16.gmra.mrb[0].mxu0 %v287
    %v438 = vpop.f32.mrb[0].mxu0
    %v439 = vadd.f32 0.0, %v438
    %v440 = vpop.f32.mrb[0].mxu0
    %v441 = vpop.f32.mrb[0].mxu0
    %v442 = vadd.f32 0.0, %v441
    %v443 = vpop.f32.mrb[0].mxu0
    %444 = vmatprep.mubr.bf16.mxu0 0
    %445 = vmatmul.mubr.bf16.gmra.mrb[0].mxu0 %v288
    %v446 = vpop.f32.mrb[0].mxu0
    %v447 = vadd.f32 0.0, %v446
    %v448 = vpop.f32.mrb[0].mxu0
    %v449 = vpop.f32.mrb[0].mxu0
    %v450 = vadd.f32 0.0, %v449
    %v451 = vpop.f32.mrb[0].mxu0
    %452 = vmatprep.mubr.bf16.mxu0 0
    %453 = vmatmul.mubr.bf16.gmra.mrb[0].mxu0 %v289
    %v454 = vpop.f32.mrb[0].mxu0
    %v455 = vadd.f32 0.0, %v454
    %v456 = vpop.f32.mrb[0].mxu0
    %v457 = vpop.f32.mrb[0].mxu0
    %v458 = vadd.f32 0.0, %v457
    %v459 = vpop.f32.mrb[0].mxu0
    %460 = vmatprep.mubr.bf16.mxu0 0
    %461 = vmatmul.mubr.bf16.gmra.mrb[0].mxu0 %v290
    %v462 = vpop.f32.mrb[0].mxu0
    %v463 = vadd.f32 0.0, %v462
    %v464 = vpop.f32.mrb[0].mxu0
    %v465 = vpop.f32.mrb[0].mxu0
    %v466 = vadd.f32 0.0, %v465
    %v467 = vpop.f32.mrb[0].mxu0
    %468 = vmatprep.mubr.bf16.mxu0 0
    %469 = vmatmul.mubr.bf16.gmra.mrb[0].mxu0 %v291
    %v470 = vpop.f32.mrb[0].mxu0
    %v471 = vadd.f32 0.0, %v470
    %v472 = vpop.f32.mrb[0].mxu0
    %v473 = vpop.f32.mrb[0].mxu0
    %v474 = vadd.f32 0.0, %v473
    %v475 = vpop.f32.mrb[0].mxu0
    %476 = vmatprep.mubr.bf16.mxu0 0
    %477 = vmatmul.mubr.bf16.gmra.mrb[0].mxu0 %v292
    %v478 = vpop.f32.mrb[0].mxu0
    %v479 = vadd.f32 0.0, %v478
    %v480 = vpop.f32.mrb[0].mxu0
    %v481 = vpop.f32.mrb[0].mxu0
    %v482 = vadd.f32 0.0, %v481
    %v483 = vpop.f32.mrb[0].mxu0
    %484 = vmatprep.mubr.bf16.mxu0 0
    %485 = vmatmul.mubr.bf16.gmra.mrb[0].mxu0 %v293
    %v486 = vpop.f32.mrb[0].mxu0
    %v487 = vadd.f32 0.0, %v486
    %v488 = vpop.f32.mrb[0].mxu0
    %v489 = vpop.f32.mrb[0].mxu0
    %v490 = vadd.f32 0.0, %v489
    %v491 = vpop.f32.mrb[0].mxu0
    %492 = vmatprep.mubr.bf16.mxu0 0
    %493 = vmatmul.mubr.bf16.gmra.mrb[0].mxu0 %v294
    %v494 = vpop.f32.mrb[0].mxu0
    %v495 = vadd.f32 0.0, %v494
    %v496 = vpop.f32.mrb[0].mxu0
    %v497 = vpop.f32.mrb[0].mxu0
    %v498 = vadd.f32 0.0, %v497
    %v499 = vpop.f32.mrb[0].mxu0
    %500 = vmatprep.mubr.bf16.mxu0 0
    %501 = vmatmul.mubr.bf16.gmra.mrb[0].mxu0 %v295
    %v502 = vpop.f32.mrb[0].mxu0
    %v503 = vadd.f32 0.0, %v502
    %v504 = vpop.f32.mrb[0].mxu0
    %v505 = vpop.f32.mrb[0].mxu0
    %v506 = vadd.f32 0.0, %v505
    %v507 = vpop.f32.mrb[0].mxu0
    %508 = vmatprep.mubr.bf16.mxu0 0
    %509 = vmatmul.mubr.bf16.gmra.mrb[0].mxu0 %v296
    %v510 = vpop.f32.mrb[0].mxu0
    %v511 = vadd.f32 0.0, %v510
    %v512 = vpop.f32.mrb[0].mxu0
    %v513 = vpop.f32.mrb[0].mxu0
    %v514 = vadd.f32 0.0, %v513
    %v515 = vpop.f32.mrb[0].mxu0
    %516 = vmatprep.mubr.bf16.mxu0 0
    %517 = vmatmul.mubr.bf16.gmra.mrb[0].mxu0 %v297
    %v518 = vpop.f32.mrb[0].mxu0
    %v519 = vadd.f32 0.0, %v518
    %v520 = vpop.f32.mrb[0].mxu0
    %v521 = vpop.f32.mrb[0].mxu0
    %v522 = vadd.f32 0.0, %v521
    %v523 = vpop.f32.mrb[0].mxu0
    %524 = vmatprep.mubr.bf16.mxu0 0
    %525 = vmatmul.mubr.bf16.gmra.mrb[0].mxu0 %v298
    %v526 = vpop.f32.mrb[0].mxu0
    %v527 = vadd.f32 0.0, %v526
    %v528 = vpop.f32.mrb[0].mxu0
    %v529 = vpop.f32.mrb[0].mxu0
    %v530 = vadd.f32 0.0, %v529
    %v531 = vpop.f32.mrb[0].mxu0
    %532 = vmatprep.mubr.bf16.mxu0 0
    %533 = vmatmul.mubr.bf16.gmra.mrb[0].mxu0 %v299
    %v534 = vpop.f32.mrb[0].mxu0
    %v535 = vadd.f32 0.0, %v534
    %v536 = vpop.f32.mrb[0].mxu0
    %v537 = vpop.f32.mrb[0].mxu0
    %v538 = vadd.f32 0.0, %v537
    %v539 = vpop.f32.mrb[0].mxu0
    %540 = vmatprep.mubr.bf16.mxu0 0
    %541 = vmatmul.mubr.bf16.gmra.mrb[0].mxu0 %v300
    %v542 = vpop.f32.mrb[0].mxu0
    %v543 = vadd.f32 0.0, %v542
    %v544 = vpop.f32.mrb[0].mxu0
    %v545 = vpop.f32.mrb[0].mxu0
    %v546 = vadd.f32 0.0, %v545
    %v547 = vpop.f32.mrb[0].mxu0
    %548 = vmatprep.mubr.bf16.mxu0 0
    %549 = vmatmul.mubr.bf16.gmra.mrb[0].mxu0 %v301
    %v550 = vpop.f32.mrb[0].mxu0
    %v551 = vadd.f32 0.0, %v550
    %v552 = vpop.f32.mrb[0].mxu0
    %v553 = vpop.f32.mrb[0].mxu0
    %v554 = vadd.f32 0.0, %v553
    %v555 = vpop.f32.mrb[0].mxu0
    %556 = vmatprep.mubr.bf16.mxu0 0
    %557 = vmatmul.mubr.bf16.gmra.mrb[0].mxu0 %v302
    %v558 = vpop.f32.mrb[0].mxu0
    %v559 = vadd.f32 0.0, %v558
    %v560 = vpop.f32.mrb[0].mxu0
    %v561 = vpop.f32.mrb[0].mxu0
    %v562 = vadd.f32 0.0, %v561
    %v563 = vpop.f32.mrb[0].mxu0
    %564 = vmatprep.mubr.bf16.mxu0 0
    %565 = vmatmul.mubr.bf16.gmra.mrb[0].mxu0 %v303
    %v566 = vpop.f32.mrb[0].mxu0
    %v567 = vadd.f32 0.0, %v566
    %v568 = vpop.f32.mrb[0].mxu0
    %v569 = vpop.f32.mrb[0].mxu0
    %v570 = vadd.f32 0.0, %v569
    %v571 = vpop.f32.mrb[0].mxu0
    %572 = vmatprep.mubr.bf16.mxu0 0
    %573 = vmatmul.mubr.bf16.gmra.mrb[0].mxu0 %v304
    %v574 = vpop.f32.mrb[0].mxu0
    %v575 = vadd.f32 0.0, %v574
    %v576 = vpop.f32.mrb[0].mxu0
    %v577 = vpop.f32.mrb[0].mxu0
    %v578 = vadd.f32 0.0, %v577
    %v579 = vpop.f32.mrb[0].mxu0
    %580 = vmatprep.mubr.bf16.mxu0 0
    %581 = vmatmul.mubr.bf16.gmra.mrb[0].mxu0 %v305
    %v582 = vpop.f32.mrb[0].mxu0
    %v583 = vadd.f32 0.0, %v582
    %v584 = vpop.f32.mrb[0].mxu0
    %v585 = vpop.f32.mrb[0].mxu0
    %v586 = vadd.f32 0.0, %v585
    %v587 = vpop.f32.mrb[0].mxu0
    %588 = vmatprep.mubr.bf16.mxu0 0
    %589 = vmatmul.mubr.bf16.gmra.mrb[0].mxu0 %v306
    %v590 = vpop.f32.mrb[0].mxu0
    %v591 = vadd.f32 0.0, %v590
    %v592 = vpop.f32.mrb[0].mxu0
    %v593 = vpop.f32.mrb[0].mxu0
    %v594 = vadd.f32 0.0, %v593
    %v595 = vpop.f32.mrb[0].mxu0
    %596 = vmatprep.mubr.bf16.mxu0 0
    %597 = vmatmul.mubr.bf16.gmra.mrb[0].mxu0 %v307
    %v598 = vpop.f32.mrb[0].mxu0
    %v599 = vadd.f32 0.0, %v598
    %v600 = vpop.f32.mrb[0].mxu0
    %v601 = vpop.f32.mrb[0].mxu0
    %v602 = vadd.f32 0.0, %v601
    %v603 = vpop.f32.mrb[0].mxu0
    %604 = vdwg.mxu0
    %v653 = vunpack.c.l.b16 %v108
    %v654 = vunpack.c.l.b16 %v109
    %v655 = vunpack.c.l.b16 %v110
    %v656 = vunpack.c.l.b16 %v111
    %v657 = vunpack.c.l.b16 %v112
    %v658 = vunpack.c.l.b16 %v113
    %v659 = vunpack.c.l.b16 %v114
    %v660 = vunpack.c.l.b16 %v115
    %v661 = vunpack.c.l.b16 %v116
    %v662 = vunpack.c.l.b16 %v117
    %v663 = vunpack.c.l.b16 %v118
    %v664 = vunpack.c.l.b16 %v119
    %v665 = vunpack.c.l.b16 %v120
    %v666 = vunpack.c.l.b16 %v121
    %v667 = vunpack.c.l.b16 %v122
    %v668 = vunpack.c.l.b16 %v123
    %v669 = vunpack.c.l.b16 %v124
    %v670 = vunpack.c.l.b16 %v125
    %v671 = vunpack.c.l.b16 %v126
    %v672 = vunpack.c.l.b16 %v127
    %v673 = vunpack.c.l.b16 %v128
    %v674 = vunpack.c.l.b16 %v129
    %v675 = vunpack.c.l.b16 %v130
    %v676 = vunpack.c.l.b16 %v131
    %v677 = vunpack.c.l.b16 %v132
    %v678 = vunpack.c.l.b16 %v133
    %v679 = vunpack.c.l.b16 %v134
    %v680 = vunpack.c.l.b16 %v135
    %v681 = vunpack.c.l.b16 %v136
    %v682 = vunpack.c.l.b16 %v137
    %v683 = vunpack.c.l.b16 %v138
    %v684 = vunpack.c.l.b16 %v139
    %v685 = vunpack.c.l.b16 %v140
    %v686 = vunpack.c.l.b16 %v141
    %v687 = vunpack.c.l.b16 %v142
    %v688 = vunpack.c.l.b16 %v143
    %v689 = vunpack.c.l.b16 %v144
    %v690 = vunpack.c.l.b16 %v145
    %v691 = vunpack.c.l.b16 %v146
    %v692 = vunpack.c.l.b16 %v147
    %v693 = vunpack.c.l.b16 %v148
    %v694 = vunpack.c.l.b16 %v149
    %v695 = vunpack.c.l.b16 %v150
    %v696 = vunpack.c.l.b16 %v151
    %v697 = vunpack.c.l.b16 %v152
    %v698 = vunpack.c.l.b16 %v153
    %v699 = vunpack.c.l.b16 %v154
    %v700 = vunpack.c.l.b16 %v155
    %v701 = vpack.c.b16 %v654, %v653
    %v702 = vpack.c.b16 %v656, %v655
    %v703 = vpack.c.b16 %v658, %v657
    %v704 = vpack.c.b16 %v660, %v659
    %v705 = vpack.c.b16 %v662, %v661
    %v706 = vpack.c.b16 %v664, %v663
    %v707 = vpack.c.b16 %v666, %v665
    %v708 = vpack.c.b16 %v668, %v667
    %v709 = vpack.c.b16 %v670, %v669
    %v710 = vpack.c.b16 %v672, %v671
    %v711 = vpack.c.b16 %v674, %v673
    %v712 = vpack.c.b16 %v676, %v675
    %v713 = vpack.c.b16 %v678, %v677
    %v714 = vpack.c.b16 %v680, %v679
    %v715 = vpack.c.b16 %v682, %v681
    %v716 = vpack.c.b16 %v684, %v683
    %v717 = vpack.c.b16 %v686, %v685
    %v718 = vpack.c.b16 %v688, %v687
    %v719 = vpack.c.b16 %v690, %v689
    %v720 = vpack.c.b16 %v692, %v691
    %v721 = vpack.c.b16 %v694, %v693
    %v722 = vpack.c.b16 %v696, %v695
    %v723 = vpack.c.b16 %v698, %v697
    %v724 = vpack.c.b16 %v700, %v699
    %v765 = vunpack.c.l.b16 %v172
    %v766 = vunpack.c.l.b16 %v173
    %v767 = vunpack.c.l.b16 %v174
    %v768 = vunpack.c.l.b16 %v175
    %v769 = vunpack.c.l.b16 %v176
    %v770 = vunpack.c.l.b16 %v177
    %v771 = vunpack.c.l.b16 %v178
    %v772 = vunpack.c.l.b16 %v179
    %v773 = vunpack.c.l.b16 %v180
    %v774 = vunpack.c.l.b16 %v181
    %v775 = vunpack.c.l.b16 %v182
    %v776 = vunpack.c.l.b16 %v183
    %v777 = vunpack.c.l.b16 %v184
    %v778 = vunpack.c.l.b16 %v185
    %v779 = vunpack.c.l.b16 %v186
    %v780 = vunpack.c.l.b16 %v187
    %v781 = vpack.c.b16 %v766, %v765
    %v782 = vpack.c.b16 %v768, %v767
    %v783 = vpack.c.b16 %v770, %v769
    %v784 = vpack.c.b16 %v772, %v771
    %v785 = vpack.c.b16 %v774, %v773
    %v786 = vpack.c.b16 %v776, %v775
    %v787 = vpack.c.b16 %v778, %v777
    %v788 = vpack.c.b16 %v780, %v779
    %797 = vmatprep.subr.bf16.mxu0 0
    %798 = vmatpush1.bf16.msra.mxu0 %v781
    %799 = vmatprep.subr.bf16.mxu0 0
    %800 = vmatpush1.bf16.msra.mxu0 %v782
    %801 = vmatprep.subr.bf16.mxu0 0
    %802 = vmatpush1.bf16.msra.mxu0 %v783
    %803 = vmatprep.subr.bf16.mxu0 0
    %804 = vmatpush1.bf16.msra.mxu0 %v784
    %805 = vmatprep.subr.bf16.mxu0 0
    %806 = vmatpush1.bf16.msra.mxu0 %v785
    %807 = vmatprep.subr.bf16.mxu0 0
    %808 = vmatpush1.bf16.msra.mxu0 %v786
    %809 = vmatprep.subr.bf16.mxu0 0
    %810 = vmatpush1.bf16.msra.mxu0 %v787
    %811 = vmatprep.subr.bf16.mxu0 0
    %812 = vmatpush1.bf16.msra.mxu0 %v788
    %813 = vmatprep.subr.bf16.mxu0 0
    %814 = vmatpush1.bf16.msra.mxu0 0
    %815 = vmatprep.subr.bf16.mxu0 0
    %816 = vmatpush1.bf16.msra.mxu0 0
    %817 = vmatprep.subr.bf16.mxu0 0
    %818 = vmatpush1.bf16.msra.mxu0 0
    %819 = vmatprep.subr.bf16.mxu0 0
    %820 = vmatpush1.bf16.msra.mxu0 0
    %821 = vmatprep.subr.bf16.mxu0 0
    %822 = vmatpush1.bf16.msra.mxu0 0
    %823 = vmatprep.subr.bf16.mxu0 0
    %824 = vmatpush1.bf16.msra.mxu0 0
    %825 = vmatprep.subr.bf16.mxu0 0
    %826 = vmatpush1.bf16.msra.mxu0 0
    %827 = vmatprep.subr.bf16.mxu0 0
    %828 = vmatpush1.bf16.msra.mxu0 0
    %829 = vmatprep.mubr.bf16.mxu0 0
    %830 = vmatmul.mubr.bf16.gmra.mrb[0].mxu0 %v701
    %v831 = vpop.f32.mrb[0].mxu0
    %v832 = vadd.f32 0.0, %v831
    %v833 = vpop.f32.mrb[0].mxu0
    %v834 = vpop.f32.mrb[0].mxu0
    %v835 = vadd.f32 0.0, %v834
    %v836 = vpop.f32.mrb[0].mxu0
    %837 = vmatprep.mubr.bf16.mxu0 0
    %838 = vmatmul.mubr.bf16.gmra.mrb[0].mxu0 %v702
    %v839 = vpop.f32.mrb[0].mxu0
    %v840 = vadd.f32 0.0, %v839
    %v841 = vpop.f32.mrb[0].mxu0
    %v842 = vpop.f32.mrb[0].mxu0
    %v843 = vadd.f32 0.0, %v842
    %v844 = vpop.f32.mrb[0].mxu0
    %845 = vmatprep.mubr.bf16.mxu0 0
    %846 = vmatmul.mubr.bf16.gmra.mrb[0].mxu0 %v703
    %v847 = vpop.f32.mrb[0].mxu0
    %v848 = vadd.f32 0.0, %v847
    %v849 = vpop.f32.mrb[0].mxu0
    %v850 = vpop.f32.mrb[0].mxu0
    %v851 = vadd.f32 0.0, %v850
    %v852 = vpop.f32.mrb[0].mxu0
    %853 = vmatprep.mubr.bf16.mxu0 0
    %854 = vmatmul.mubr.bf16.gmra.mrb[0].mxu0 %v704
    %v855 = vpop.f32.mrb[0].mxu0
    %v856 = vadd.f32 0.0, %v855
    %v857 = vpop.f32.mrb[0].mxu0
    %v858 = vpop.f32.mrb[0].mxu0
    %v859 = vadd.f32 0.0, %v858
    %v860 = vpop.f32.mrb[0].mxu0
    %861 = vmatprep.mubr.bf16.mxu0 0
    %862 = vmatmul.mubr.bf16.gmra.mrb[0].mxu0 %v705
    %v863 = vpop.f32.mrb[0].mxu0
    %v864 = vadd.f32 0.0, %v863
    %v865 = vpop.f32.mrb[0].mxu0
    %v866 = vpop.f32.mrb[0].mxu0
    %v867 = vadd.f32 0.0, %v866
    %v868 = vpop.f32.mrb[0].mxu0
    %869 = vmatprep.mubr.bf16.mxu0 0
    %870 = vmatmul.mubr.bf16.gmra.mrb[0].mxu0 %v706
    %v871 = vpop.f32.mrb[0].mxu0
    %v872 = vadd.f32 0.0, %v871
    %v873 = vpop.f32.mrb[0].mxu0
    %v874 = vpop.f32.mrb[0].mxu0
    %v875 = vadd.f32 0.0, %v874
    %v876 = vpop.f32.mrb[0].mxu0
    %877 = vmatprep.mubr.bf16.mxu0 0
    %878 = vmatmul.mubr.bf16.gmra.mrb[0].mxu0 %v707
    %v879 = vpop.f32.mrb[0].mxu0
    %v880 = vadd.f32 0.0, %v879
    %v881 = vpop.f32.mrb[0].mxu0
    %v882 = vpop.f32.mrb[0].mxu0
    %v883 = vadd.f32 0.0, %v882
    %v884 = vpop.f32.mrb[0].mxu0
    %885 = vmatprep.mubr.bf16.mxu0 0
    %886 = vmatmul.mubr.bf16.gmra.mrb[0].mxu0 %v708
    %v887 = vpop.f32.mrb[0].mxu0
    %v888 = vadd.f32 0.0, %v887
    %v889 = vpop.f32.mrb[0].mxu0
    %v890 = vpop.f32.mrb[0].mxu0
    %v891 = vadd.f32 0.0, %v890
    %v892 = vpop.f32.mrb[0].mxu0
    %893 = vmatprep.mubr.bf16.mxu0 0
    %894 = vmatmul.mubr.bf16.gmra.mrb[0].mxu0 %v709
    %v895 = vpop.f32.mrb[0].mxu0
    %v896 = vadd.f32 0.0, %v895
    %v897 = vpop.f32.mrb[0].mxu0
    %v898 = vpop.f32.mrb[0].mxu0
    %v899 = vadd.f32 0.0, %v898
    %v900 = vpop.f32.mrb[0].mxu0
    %901 = vmatprep.mubr.bf16.mxu0 0
    %902 = vmatmul.mubr.bf16.gmra.mrb[0].mxu0 %v710
    %v903 = vpop.f32.mrb[0].mxu0
    %v904 = vadd.f32 0.0, %v903
    %v905 = vpop.f32.mrb[0].mxu0
    %v906 = vpop.f32.mrb[0].mxu0
    %v907 = vadd.f32 0.0, %v906
    %v908 = vpop.f32.mrb[0].mxu0
    %909 = vmatprep.mubr.bf16.mxu0 0
    %910 = vmatmul.mubr.bf16.gmra.mrb[0].mxu0 %v711
    %v911 = vpop.f32.mrb[0].mxu0
    %v912 = vadd.f32 0.0, %v911
    %v913 = vpop.f32.mrb[0].mxu0
    %v914 = vpop.f32.mrb[0].mxu0
    %v915 = vadd.f32 0.0, %v914
    %v916 = vpop.f32.mrb[0].mxu0
    %917 = vmatprep.mubr.bf16.mxu0 0
    %918 = vmatmul.mubr.bf16.gmra.mrb[0].mxu0 %v712
    %v919 = vpop.f32.mrb[0].mxu0
    %v920 = vadd.f32 0.0, %v919
    %v921 = vpop.f32.mrb[0].mxu0
    %v922 = vpop.f32.mrb[0].mxu0
    %v923 = vadd.f32 0.0, %v922
    %v924 = vpop.f32.mrb[0].mxu0
    %925 = vmatprep.mubr.bf16.mxu0 0
    %926 = vmatmul.mubr.bf16.gmra.mrb[0].mxu0 %v713
    %v927 = vpop.f32.mrb[0].mxu0
    %v928 = vadd.f32 0.0, %v927
    %v929 = vpop.f32.mrb[0].mxu0
    %v930 = vpop.f32.mrb[0].mxu0
    %v931 = vadd.f32 0.0, %v930
    %v932 = vpop.f32.mrb[0].mxu0
    %933 = vmatprep.mubr.bf16.mxu0 0
    %934 = vmatmul.mubr.bf16.gmra.mrb[0].mxu0 %v714
    %v935 = vpop.f32.mrb[0].mxu0
    %v936 = vadd.f32 0.0, %v935
    %v937 = vpop.f32.mrb[0].mxu0
    %v938 = vpop.f32.mrb[0].mxu0
    %v939 = vadd.f32 0.0, %v938
    %v940 = vpop.f32.mrb[0].mxu0
    %941 = vmatprep.mubr.bf16.mxu0 0
    %942 = vmatmul.mubr.bf16.gmra.mrb[0].mxu0 %v715
    %v943 = vpop.f32.mrb[0].mxu0
    %v944 = vadd.f32 0.0, %v943
    %v945 = vpop.f32.mrb[0].mxu0
    %v946 = vpop.f32.mrb[0].mxu0
    %v947 = vadd.f32 0.0, %v946
    %v948 = vpop.f32.mrb[0].mxu0
    %949 = vmatprep.mubr.bf16.mxu0 0
    %950 = vmatmul.mubr.bf16.gmra.mrb[0].mxu0 %v716
    %v951 = vpop.f32.mrb[0].mxu0
    %v952 = vadd.f32 0.0, %v951
    %v953 = vpop.f32.mrb[0].mxu0
    %v954 = vpop.f32.mrb[0].mxu0
    %v955 = vadd.f32 0.0, %v954
    %v956 = vpop.f32.mrb[0].mxu0
    %957 = vmatprep.mubr.bf16.mxu0 0
    %958 = vmatmul.mubr.bf16.gmra.mrb[0].mxu0 %v717
    %v959 = vpop.f32.mrb[0].mxu0
    %v960 = vadd.f32 0.0, %v959
    %v961 = vpop.f32.mrb[0].mxu0
    %v962 = vpop.f32.mrb[0].mxu0
    %v963 = vadd.f32 0.0, %v962
    %v964 = vpop.f32.mrb[0].mxu0
    %965 = vmatprep.mubr.bf16.mxu0 0
    %966 = vmatmul.mubr.bf16.gmra.mrb[0].mxu0 %v718
    %v967 = vpop.f32.mrb[0].mxu0
    %v968 = vadd.f32 0.0, %v967
    %v969 = vpop.f32.mrb[0].mxu0
    %v970 = vpop.f32.mrb[0].mxu0
    %v971 = vadd.f32 0.0, %v970
    %v972 = vpop.f32.mrb[0].mxu0
    %973 = vmatprep.mubr.bf16.mxu0 0
    %974 = vmatmul.mubr.bf16.gmra.mrb[0].mxu0 %v719
    %v975 = vpop.f32.mrb[0].mxu0
    %v976 = vadd.f32 0.0, %v975
    %v977 = vpop.f32.mrb[0].mxu0
    %v978 = vpop.f32.mrb[0].mxu0
    %v979 = vadd.f32 0.0, %v978
    %v980 = vpop.f32.mrb[0].mxu0
    %981 = vmatprep.mubr.bf16.mxu0 0
    %982 = vmatmul.mubr.bf16.gmra.mrb[0].mxu0 %v720
    %v983 = vpop.f32.mrb[0].mxu0
    %v984 = vadd.f32 0.0, %v983
    %v985 = vpop.f32.mrb[0].mxu0
    %v986 = vpop.f32.mrb[0].mxu0
    %v987 = vadd.f32 0.0, %v986
    %v988 = vpop.f32.mrb[0].mxu0
    %989 = vmatprep.mubr.bf16.mxu0 0
    %990 = vmatmul.mubr.bf16.gmra.mrb[0].mxu0 %v721
    %v991 = vpop.f32.mrb[0].mxu0
    %v992 = vadd.f32 0.0, %v991
    %v993 = vpop.f32.mrb[0].mxu0
    %v994 = vpop.f32.mrb[0].mxu0
    %v995 = vadd.f32 0.0, %v994
    %v996 = vpop.f32.mrb[0].mxu0
    %997 = vmatprep.mubr.bf16.mxu0 0
    %998 = vmatmul.mubr.bf16.gmra.mrb[0].mxu0 %v722
    %v999 = vpop.f32.mrb[0].mxu0
    %v1000 = vadd.f32 0.0, %v999
    %v1001 = vpop.f32.mrb[0].mxu0
    %v1002 = vpop.f32.mrb[0].mxu0
    %v1003 = vadd.f32 0.0, %v1002
    %v1004 = vpop.f32.mrb[0].mxu0
    %1005 = vmatprep.mubr.bf16.mxu0 0
    %1006 = vmatmul.mubr.bf16.gmra.mrb[0].mxu0 %v723
    %v1007 = vpop.f32.mrb[0].mxu0
    %v1008 = vadd.f32 0.0, %v1007
    %v1009 = vpop.f32.mrb[0].mxu0
    %v1010 = vpop.f32.mrb[0].mxu0
    %v1011 = vadd.f32 0.0, %v1010
    %v1012 = vpop.f32.mrb[0].mxu0
    %1013 = vmatprep.mubr.bf16.mxu0 0
    %1014 = vmatmul.mubr.bf16.gmra.mrb[0].mxu0 %v724
    %v1015 = vpop.f32.mrb[0].mxu0
    %v1016 = vadd.f32 0.0, %v1015
    %v1017 = vpop.f32.mrb[0].mxu0
    %v1018 = vpop.f32.mrb[0].mxu0
    %v1019 = vadd.f32 0.0, %v1018
    %v1020 = vpop.f32.mrb[0].mxu0
    %1021 = vdwg.mxu0
    %v1022 = vpack.c.bf16 %v418, %v415
    %v1023 = vpack.c.bf16 %v426, %v423
    %v1024 = vpack.c.bf16 %v434, %v431
    %v1025 = vpack.c.bf16 %v442, %v439
    %v1026 = vpack.c.bf16 %v450, %v447
    %v1027 = vpack.c.bf16 %v458, %v455
    %v1028 = vpack.c.bf16 %v466, %v463
    %v1029 = vpack.c.bf16 %v474, %v471
    %v1030 = vpack.c.bf16 %v482, %v479
    %v1031 = vpack.c.bf16 %v490, %v487
    %v1032 = vpack.c.bf16 %v498, %v495
    %v1033 = vpack.c.bf16 %v506, %v503
    %v1034 = vpack.c.bf16 %v514, %v511
    %v1035 = vpack.c.bf16 %v522, %v519
    %v1036 = vpack.c.bf16 %v530, %v527
    %v1037 = vpack.c.bf16 %v538, %v535
    %v1038 = vpack.c.bf16 %v546, %v543
    %v1039 = vpack.c.bf16 %v554, %v551
    %v1040 = vpack.c.bf16 %v562, %v559
    %v1041 = vpack.c.bf16 %v570, %v567
    %v1042 = vpack.c.bf16 %v578, %v575
    %v1043 = vpack.c.bf16 %v586, %v583
    %v1044 = vpack.c.bf16 %v594, %v591
    %v1045 = vpack.c.bf16 %v602, %v599
    %v1046 = vpack.c.bf16 %v835, %v832
    %v1047 = vpack.c.bf16 %v843, %v840
    %v1048 = vpack.c.bf16 %v851, %v848
    %v1049 = vpack.c.bf16 %v859, %v856
    %v1050 = vpack.c.bf16 %v867, %v864
    %v1051 = vpack.c.bf16 %v875, %v872
    %v1052 = vpack.c.bf16 %v883, %v880
    %v1053 = vpack.c.bf16 %v891, %v888
    %v1054 = vpack.c.bf16 %v899, %v896
    %v1055 = vpack.c.bf16 %v907, %v904
    %v1056 = vpack.c.bf16 %v915, %v912
    %v1057 = vpack.c.bf16 %v923, %v920
    %v1058 = vpack.c.bf16 %v931, %v928
    %v1059 = vpack.c.bf16 %v939, %v936
    %v1060 = vpack.c.bf16 %v947, %v944
    %v1061 = vpack.c.bf16 %v955, %v952
    %v1062 = vpack.c.bf16 %v963, %v960
    %v1063 = vpack.c.bf16 %v971, %v968
    %v1064 = vpack.c.bf16 %v979, %v976
    %v1065 = vpack.c.bf16 %v987, %v984
    %v1066 = vpack.c.bf16 %v995, %v992
    %v1067 = vpack.c.bf16 %v1003, %v1000
    %v1068 = vpack.c.bf16 %v1011, %v1008
    %v1069 = vpack.c.bf16 %v1019, %v1016
    %v1070 = vld [vmem:[#allocation7] sm:$0xf]
    %v1071 = vld [vmem:[#allocation7 + $0x4] sm:$0xf]
    %v1072 = vld [vmem:[#allocation7 + $0x8] sm:$0xf]
    %v1073 = vld [vmem:[#allocation7 + $0xc] sm:$0xf]
    %v1074 = vld [vmem:[#allocation7 + $0x10] sm:$0xf]
    %v1075 = vld [vmem:[#allocation7 + $0x14] sm:$0xf]
    %v1076 = vld [vmem:[#allocation7 + $0x18] sm:$0xf]
    %v1077 = vld [vmem:[#allocation7 + $0x1c] sm:$0xf]
    %v1078 = vld [vmem:[#allocation7 + $0x20] sm:$0xf]
    %v1079 = vld [vmem:[#allocation7 + $0x24] sm:$0xf]
    %v1080 = vld [vmem:[#allocation7 + $0x28] sm:$0xf]
    %v1081 = vld [vmem:[#allocation7 + $0x2c] sm:$0xf]
    %v1082 = vld [vmem:[#allocation7 + $0x30] sm:$0xf]
    %v1083 = vld [vmem:[#allocation7 + $0x34] sm:$0xf]
    %v1084 = vld [vmem:[#allocation7 + $0x38] sm:$0xf]
    %v1085 = vld [vmem:[#allocation7 + $0x3c] sm:$0xf]
    %v1086 = vld [vmem:[#allocation7 + $0x40] sm:$0xf]
    %v1087 = vld [vmem:[#allocation7 + $0x44] sm:$0xf]
    %v1088 = vld [vmem:[#allocation7 + $0x48] sm:$0xf]
    %v1089 = vld [vmem:[#allocation7 + $0x4c] sm:$0xf]
    %v1090 = vld [vmem:[#allocation7 + $0x50] sm:$0xf]
    %v1091 = vld [vmem:[#allocation7 + $0x54] sm:$0xf]
    %v1092 = vld [vmem:[#allocation7 + $0x58] sm:$0xf]
    %v1093 = vld [vmem:[#allocation7 + $0x5c] sm:$0xf]
    %v1094 = vld [vmem:[#allocation7 + $0x60] sm:$0xf]
    %v1095 = vld [vmem:[#allocation7 + $0x64] sm:$0xf]
    %v1096 = vld [vmem:[#allocation7 + $0x68] sm:$0xf]
    %v1097 = vld [vmem:[#allocation7 + $0x6c] sm:$0xf]
    %v1098 = vld [vmem:[#allocation7 + $0x70] sm:$0xf]
    %v1099 = vld [vmem:[#allocation7 + $0x74] sm:$0xf]
    %v1100 = vld [vmem:[#allocation7 + $0x78] sm:$0xf]
    %v1101 = vld [vmem:[#allocation7 + $0x7c] sm:$0xf]
    %v1102 = vld [vmem:[#allocation7 + $0x80] sm:$0xf]
    %v1103 = vld [vmem:[#allocation7 + $0x84] sm:$0xf]
    %v1104 = vld [vmem:[#allocation7 + $0x88] sm:$0xf]
    %v1105 = vld [vmem:[#allocation7 + $0x8c] sm:$0xf]
    %v1106 = vld [vmem:[#allocation7 + $0x90] sm:$0xf]
    %v1107 = vld [vmem:[#allocation7 + $0x94] sm:$0xf]
    %v1108 = vld [vmem:[#allocation7 + $0x98] sm:$0xf]
    %v1109 = vld [vmem:[#allocation7 + $0x9c] sm:$0xf]
    %v1110 = vld [vmem:[#allocation7 + $0xa0] sm:$0xf]
    %v1111 = vld [vmem:[#allocation7 + $0xa4] sm:$0xf]
    %v1112 = vld [vmem:[#allocation7 + $0xa8] sm:$0xf]
    %v1113 = vld [vmem:[#allocation7 + $0xac] sm:$0xf]
    %v1114 = vld [vmem:[#allocation7 + $0xb0] sm:$0xf]
    %v1115 = vld [vmem:[#allocation7 + $0xb4] sm:$0xf]
    %v1116 = vld [vmem:[#allocation7 + $0xb8] sm:$0xf]
    %v1117 = vld [vmem:[#allocation7 + $0xbc] sm:$0xf]
    %v1118 = vld [vmem:[%s3] sm:$0x1]
    %v1120 = vlaneseq
    %v1121 = vshrl.u32 %v1120, 7
    %v1122 = vsub.s32 0, %v1121
    %v1123 = vrot.slane %v1118, %v1122
    %v1173 = vunpack.c.l.b16 %v1070
    %v1174 = vunpack.c.l.b16 %v1071
    %v1175 = vunpack.c.l.b16 %v1072
    %v1176 = vunpack.c.l.b16 %v1073
    %v1177 = vunpack.c.l.b16 %v1074
    %v1178 = vunpack.c.l.b16 %v1075
    %v1179 = vunpack.c.l.b16 %v1076
    %v1180 = vunpack.c.l.b16 %v1077
    %v1181 = vunpack.c.l.b16 %v1078
    %v1182 = vunpack.c.l.b16 %v1079
    %v1183 = vunpack.c.l.b16 %v1080
    %v1184 = vunpack.c.l.b16 %v1081
    %v1185 = vunpack.c.l.b16 %v1082
    %v1186 = vunpack.c.l.b16 %v1083
    %v1187 = vunpack.c.l.b16 %v1084
    %v1188 = vunpack.c.l.b16 %v1085
    %v1189 = vunpack.c.l.b16 %v1086
    %v1190 = vunpack.c.l.b16 %v1087
    %v1191 = vunpack.c.l.b16 %v1088
    %v1192 = vunpack.c.l.b16 %v1089
    %v1193 = vunpack.c.l.b16 %v1090
    %v1194 = vunpack.c.l.b16 %v1091
    %v1195 = vunpack.c.l.b16 %v1092
    %v1196 = vunpack.c.l.b16 %v1093
    %v1197 = vunpack.c.l.b16 %v1094
    %v1198 = vunpack.c.l.b16 %v1095
    %v1199 = vunpack.c.l.b16 %v1096
    %v1200 = vunpack.c.l.b16 %v1097
    %v1201 = vunpack.c.l.b16 %v1098
    %v1202 = vunpack.c.l.b16 %v1099
    %v1203 = vunpack.c.l.b16 %v1100
    %v1204 = vunpack.c.l.b16 %v1101
    %v1205 = vunpack.c.l.b16 %v1102
    %v1206 = vunpack.c.l.b16 %v1103
    %v1207 = vunpack.c.l.b16 %v1104
    %v1208 = vunpack.c.l.b16 %v1105
    %v1209 = vunpack.c.l.b16 %v1106
    %v1210 = vunpack.c.l.b16 %v1107
    %v1211 = vunpack.c.l.b16 %v1108
    %v1212 = vunpack.c.l.b16 %v1109
    %v1213 = vunpack.c.l.b16 %v1110
    %v1214 = vunpack.c.l.b16 %v1111
    %v1215 = vunpack.c.l.b16 %v1112
    %v1216 = vunpack.c.l.b16 %v1113
    %v1217 = vunpack.c.l.b16 %v1114
    %v1218 = vunpack.c.l.b16 %v1115
    %v1219 = vunpack.c.l.b16 %v1116
    %v1220 = vunpack.c.l.b16 %v1117
    %v1221 = vpack.c.b16 %v1174, %v1173
    %v1222 = vpack.c.b16 %v1176, %v1175
    %v1223 = vpack.c.b16 %v1178, %v1177
    %v1224 = vpack.c.b16 %v1180, %v1179
    %v1225 = vpack.c.b16 %v1182, %v1181
    %v1226 = vpack.c.b16 %v1184, %v1183
    %v1227 = vpack.c.b16 %v1186, %v1185
    %v1228 = vpack.c.b16 %v1188, %v1187
    %v1229 = vpack.c.b16 %v1190, %v1189
    %v1230 = vpack.c.b16 %v1192, %v1191
    %v1231 = vpack.c.b16 %v1194, %v1193
    %v1232 = vpack.c.b16 %v1196, %v1195
    %v1233 = vpack.c.b16 %v1198, %v1197
    %v1234 = vpack.c.b16 %v1200, %v1199
    %v1235 = vpack.c.b16 %v1202, %v1201
    %v1236 = vpack.c.b16 %v1204, %v1203
    %v1237 = vpack.c.b16 %v1206, %v1205
    %v1238 = vpack.c.b16 %v1208, %v1207
    %v1239 = vpack.c.b16 %v1210, %v1209
    %v1240 = vpack.c.b16 %v1212, %v1211
    %v1241 = vpack.c.b16 %v1214, %v1213
    %v1242 = vpack.c.b16 %v1216, %v1215
    %v1243 = vpack.c.b16 %v1218, %v1217
    %v1244 = vpack.c.b16 %v1220, %v1219
    %1269 = vmatprep.subr.bf16.mxu0 0
    %1270 = vmatpush1.bf16.msra.mxu0 %v1221
    %1271 = vmatprep.subr.bf16.mxu0 0
    %1272 = vmatpush1.bf16.msra.mxu0 %v1222
    %1273 = vmatprep.subr.bf16.mxu0 0
    %1274 = vmatpush1.bf16.msra.mxu0 %v1223
    %1275 = vmatprep.subr.bf16.mxu0 0
    %1276 = vmatpush1.bf16.msra.mxu0 %v1224
    %1277 = vmatprep.subr.bf16.mxu0 0
    %1278 = vmatpush1.bf16.msra.mxu0 %v1225
    %1279 = vmatprep.subr.bf16.mxu0 0
    %1280 = vmatpush1.bf16.msra.mxu0 %v1226
    %1281 = vmatprep.subr.bf16.mxu0 0
    %1282 = vmatpush1.bf16.msra.mxu0 %v1227
    %1283 = vmatprep.subr.bf16.mxu0 0
    %1284 = vmatpush1.bf16.msra.mxu0 %v1228
    %1285 = vmatprep.subr.bf16.mxu0 0
    %1286 = vmatpush1.bf16.msra.mxu0 %v1229
    %1287 = vmatprep.subr.bf16.mxu0 0
    %1288 = vmatpush1.bf16.msra.mxu0 %v1230
    %1289 = vmatprep.subr.bf16.mxu0 0
    %1290 = vmatpush1.bf16.msra.mxu0 %v1231
    %1291 = vmatprep.subr.bf16.mxu0 0
    %1292 = vmatpush1.bf16.msra.mxu0 %v1232
    %1293 = vmatprep.subr.bf16.mxu0 0
    %1294 = vmatpush1.bf16.msra.mxu0 %v1233
    %1295 = vmatprep.subr.bf16.mxu0 0
    %1296 = vmatpush1.bf16.msra.mxu0 %v1234
    %1297 = vmatprep.subr.bf16.mxu0 0
    %1298 = vmatpush1.bf16.msra.mxu0 %v1235
    %1299 = vmatprep.subr.bf16.mxu0 0
    %1300 = vmatpush1.bf16.msra.mxu0 %v1236
    %1301 = vmatprep.mubr.bf16.mxu0 %v1030
    %1302 = vmatmul.mubr.bf16.gmra.mrb[0].mxu0 %v1022
    %v1303 = vpop.f32.mrb[0].mxu0
    %v1304 = vadd.f32 %v1123, %v1303
    %v1305 = vpop.f32.mrb[0].mxu0
    %v1306 = vpop.f32.mrb[0].mxu0
    %v1307 = vadd.f32 %v1123, %v1306
    %v1308 = vpop.f32.mrb[0].mxu0
    %1309 = vmatprep.mubr.bf16.mxu0 %v1031
    %1310 = vmatmul.mubr.bf16.gmra.mrb[0].mxu0 %v1023
    %v1311 = vpop.f32.mrb[0].mxu0
    %v1312 = vadd.f32 %v1123, %v1311
    %v1313 = vpop.f32.mrb[0].mxu0
    %v1314 = vpop.f32.mrb[0].mxu0
    %v1315 = vadd.f32 %v1123, %v1314
    %v1316 = vpop.f32.mrb[0].mxu0
    %1317 = vmatprep.mubr.bf16.mxu0 %v1032
    %1318 = vmatmul.mubr.bf16.gmra.mrb[0].mxu0 %v1024
    %v1319 = vpop.f32.mrb[0].mxu0
    %v1320 = vadd.f32 %v1123, %v1319
    %v1321 = vpop.f32.mrb[0].mxu0
    %v1322 = vpop.f32.mrb[0].mxu0
    %v1323 = vadd.f32 %v1123, %v1322
    %v1324 = vpop.f32.mrb[0].mxu0
    %1325 = vmatprep.mubr.bf16.mxu0 %v1033
    %1326 = vmatmul.mubr.bf16.gmra.mrb[0].mxu0 %v1025
    %v1327 = vpop.f32.mrb[0].mxu0
    %v1328 = vadd.f32 %v1123, %v1327
    %v1329 = vpop.f32.mrb[0].mxu0
    %v1330 = vpop.f32.mrb[0].mxu0
    %v1331 = vadd.f32 %v1123, %v1330
    %v1332 = vpop.f32.mrb[0].mxu0
    %1333 = vmatprep.mubr.bf16.mxu0 %v1034
    %1334 = vmatmul.mubr.bf16.gmra.mrb[0].mxu0 %v1026
    %v1335 = vpop.f32.mrb[0].mxu0
    %v1336 = vadd.f32 %v1123, %v1335
    %v1337 = vpop.f32.mrb[0].mxu0
    %v1338 = vpop.f32.mrb[0].mxu0
    %v1339 = vadd.f32 %v1123, %v1338
    %v1340 = vpop.f32.mrb[0].mxu0
    %1341 = vmatprep.mubr.bf16.mxu0 %v1035
    %1342 = vmatmul.mubr.bf16.gmra.mrb[0].mxu0 %v1027
    %v1343 = vpop.f32.mrb[0].mxu0
    %v1344 = vadd.f32 %v1123, %v1343
    %v1345 = vpop.f32.mrb[0].mxu0
    %v1346 = vpop.f32.mrb[0].mxu0
    %v1347 = vadd.f32 %v1123, %v1346
    %v1348 = vpop.f32.mrb[0].mxu0
    %1349 = vmatprep.mubr.bf16.mxu0 %v1036
    %1350 = vmatmul.mubr.bf16.gmra.mrb[0].mxu0 %v1028
    %v1351 = vpop.f32.mrb[0].mxu0
    %v1352 = vadd.f32 %v1123, %v1351
    %v1353 = vpop.f32.mrb[0].mxu0
    %v1354 = vpop.f32.mrb[0].mxu0
    %v1355 = vadd.f32 %v1123, %v1354
    %v1356 = vpop.f32.mrb[0].mxu0
    %1357 = vmatprep.mubr.bf16.mxu0 %v1037
    %1358 = vmatmul.mubr.bf16.gmra.mrb[0].mxu0 %v1029
    %v1359 = vpop.f32.mrb[0].mxu0
    %v1360 = vadd.f32 %v1123, %v1359
    %v1361 = vpop.f32.mrb[0].mxu0
    %v1362 = vpop.f32.mrb[0].mxu0
    %v1363 = vadd.f32 %v1123, %v1362
    %v1364 = vpop.f32.mrb[0].mxu0
    %1365 = vmatprep.mubr.bf16.mxu0 %v1054
    %1366 = vmatmul.mubr.bf16.gmra.mrb[0].mxu0 %v1046
    %v1367 = vpop.f32.mrb[0].mxu0
    %v1368 = vadd.f32 %v1123, %v1367
    %v1369 = vpop.f32.mrb[0].mxu0
    %v1370 = vpop.f32.mrb[0].mxu0
    %v1371 = vadd.f32 %v1123, %v1370
    %v1372 = vpop.f32.mrb[0].mxu0
    %1373 = vmatprep.mubr.bf16.mxu0 %v1055
    %1374 = vmatmul.mubr.bf16.gmra.mrb[0].mxu0 %v1047
    %v1375 = vpop.f32.mrb[0].mxu0
    %v1376 = vadd.f32 %v1123, %v1375
    %v1377 = vpop.f32.mrb[0].mxu0
    %v1378 = vpop.f32.mrb[0].mxu0
    %v1379 = vadd.f32 %v1123, %v1378
    %v1380 = vpop.f32.mrb[0].mxu0
    %1381 = vmatprep.mubr.bf16.mxu0 %v1056
    %1382 = vmatmul.mubr.bf16.gmra.mrb[0].mxu0 %v1048
    %v1383 = vpop.f32.mrb[0].mxu0
    %v1384 = vadd.f32 %v1123, %v1383
    %v1385 = vpop.f32.mrb[0].mxu0
    %v1386 = vpop.f32.mrb[0].mxu0
    %v1387 = vadd.f32 %v1123, %v1386
    %v1388 = vpop.f32.mrb[0].mxu0
    %1389 = vmatprep.mubr.bf16.mxu0 %v1057
    %1390 = vmatmul.mubr.bf16.gmra.mrb[0].mxu0 %v1049
    %v1391 = vpop.f32.mrb[0].mxu0
    %v1392 = vadd.f32 %v1123, %v1391
    %v1393 = vpop.f32.mrb[0].mxu0
    %v1394 = vpop.f32.mrb[0].mxu0
    %v1395 = vadd.f32 %v1123, %v1394
    %v1396 = vpop.f32.mrb[0].mxu0
    %1397 = vmatprep.mubr.bf16.mxu0 %v1058
    %1398 = vmatmul.mubr.bf16.gmra.mrb[0].mxu0 %v1050
    %v1399 = vpop.f32.mrb[0].mxu0
    %v1400 = vadd.f32 %v1123, %v1399
    %v1401 = vpop.f32.mrb[0].mxu0
    %v1402 = vpop.f32.mrb[0].mxu0
    %v1403 = vadd.f32 %v1123, %v1402
    %v1404 = vpop.f32.mrb[0].mxu0
    %1405 = vmatprep.mubr.bf16.mxu0 %v1059
    %1406 = vmatmul.mubr.bf16.gmra.mrb[0].mxu0 %v1051
    %v1407 = vpop.f32.mrb[0].mxu0
    %v1408 = vadd.f32 %v1123, %v1407
    %v1409 = vpop.f32.mrb[0].mxu0
    %v1410 = vpop.f32.mrb[0].mxu0
    %v1411 = vadd.f32 %v1123, %v1410
    %v1412 = vpop.f32.mrb[0].mxu0
    %1413 = vmatprep.mubr.bf16.mxu0 %v1060
    %1414 = vmatmul.mubr.bf16.gmra.mrb[0].mxu0 %v1052
    %v1415 = vpop.f32.mrb[0].mxu0
    %v1416 = vadd.f32 %v1123, %v1415
    %v1417 = vpop.f32.mrb[0].mxu0
    %v1418 = vpop.f32.mrb[0].mxu0
    %v1419 = vadd.f32 %v1123, %v1418
    %v1420 = vpop.f32.mrb[0].mxu0
    %1421 = vmatprep.mubr.bf16.mxu0 %v1061
    %1422 = vmatmul.mubr.bf16.gmra.mrb[0].mxu0 %v1053
    %v1423 = vpop.f32.mrb[0].mxu0
    %v1424 = vadd.f32 %v1123, %v1423
    %v1425 = vpop.f32.mrb[0].mxu0
    %v1426 = vpop.f32.mrb[0].mxu0
    %v1427 = vadd.f32 %v1123, %v1426
    %v1428 = vpop.f32.mrb[0].mxu0
    %1429 = vdwg.mxu0
    %1430 = vmatprep.subr.bf16.mxu0 0
    %1431 = vmatpush1.bf16.msra.mxu0 %v1237
    %1432 = vmatprep.subr.bf16.mxu0 0
    %1433 = vmatpush1.bf16.msra.mxu0 %v1238
    %1434 = vmatprep.subr.bf16.mxu0 0
    %1435 = vmatpush1.bf16.msra.mxu0 %v1239
    %1436 = vmatprep.subr.bf16.mxu0 0
    %1437 = vmatpush1.bf16.msra.mxu0 %v1240
    %1438 = vmatprep.subr.bf16.mxu0 0
    %1439 = vmatpush1.bf16.msra.mxu0 %v1241
    %1440 = vmatprep.subr.bf16.mxu0 0
    %1441 = vmatpush1.bf16.msra.mxu0 %v1242
    %1442 = vmatprep.subr.bf16.mxu0 0
    %1443 = vmatpush1.bf16.msra.mxu0 %v1243
    %1444 = vmatprep.subr.bf16.mxu0 0
    %1445 = vmatpush1.bf16.msra.mxu0 %v1244
    %1446 = vmatprep.subr.bf16.mxu0 0
    %1447 = vmatpush1.bf16.msra.mxu0 0
    %1448 = vmatprep.subr.bf16.mxu0 0
    %1449 = vmatpush1.bf16.msra.mxu0 0
    %1450 = vmatprep.subr.bf16.mxu0 0
    %1451 = vmatpush1.bf16.msra.mxu0 0
    %1452 = vmatprep.subr.bf16.mxu0 0
    %1453 = vmatpush1.bf16.msra.mxu0 0
    %1454 = vmatprep.subr.bf16.mxu0 0
    %1455 = vmatpush1.bf16.msra.mxu0 0
    %1456 = vmatprep.subr.bf16.mxu0 0
    %1457 = vmatpush1.bf16.msra.mxu0 0
    %1458 = vmatprep.subr.bf16.mxu0 0
    %1459 = vmatpush1.bf16.msra.mxu0 0
    %1460 = vmatprep.subr.bf16.mxu0 0
    %1461 = vmatpush1.bf16.msra.mxu0 0
    %1462 = vmatprep.mubr.bf16.mxu0 0
    %1463 = vmatmul.mubr.bf16.gmra.mrb[0].mxu0 %v1038
    %v1464 = vpop.f32.mrb[0].mxu0
    %v1465 = vadd.f32 %v1304, %v1464
    %v1466 = vpop.f32.mrb[0].mxu0
    %v1467 = vpop.f32.mrb[0].mxu0
    %v1468 = vadd.f32 %v1307, %v1467
    %v1469 = vpop.f32.mrb[0].mxu0
    %1470 = vmatprep.mubr.bf16.mxu0 0
    %1471 = vmatmul.mubr.bf16.gmra.mrb[0].mxu0 %v1039
    %v1472 = vpop.f32.mrb[0].mxu0
    %v1473 = vadd.f32 %v1312, %v1472
    %v1474 = vpop.f32.mrb[0].mxu0
    %v1475 = vpop.f32.mrb[0].mxu0
    %v1476 = vadd.f32 %v1315, %v1475
    %v1477 = vpop.f32.mrb[0].mxu0
    %1478 = vmatprep.mubr.bf16.mxu0 0
    %1479 = vmatmul.mubr.bf16.gmra.mrb[0].mxu0 %v1040
    %v1480 = vpop.f32.mrb[0].mxu0
    %v1481 = vadd.f32 %v1320, %v1480
    %v1482 = vpop.f32.mrb[0].mxu0
    %v1483 = vpop.f32.mrb[0].mxu0
    %v1484 = vadd.f32 %v1323, %v1483
    %v1485 = vpop.f32.mrb[0].mxu0
    %1486 = vmatprep.mubr.bf16.mxu0 0
    %1487 = vmatmul.mubr.bf16.gmra.mrb[0].mxu0 %v1041
    %v1488 = vpop.f32.mrb[0].mxu0
    %v1489 = vadd.f32 %v1328, %v1488
    %v1490 = vpop.f32.mrb[0].mxu0
    %v1491 = vpop.f32.mrb[0].mxu0
    %v1492 = vadd.f32 %v1331, %v1491
    %v1493 = vpop.f32.mrb[0].mxu0
    %1494 = vmatprep.mubr.bf16.mxu0 0
    %1495 = vmatmul.mubr.bf16.gmra.mrb[0].mxu0 %v1042
    %v1496 = vpop.f32.mrb[0].mxu0
    %v1497 = vadd.f32 %v1336, %v1496
    %v1498 = vpop.f32.mrb[0].mxu0
    %v1499 = vpop.f32.mrb[0].mxu0
    %v1500 = vadd.f32 %v1339, %v1499
    %v1501 = vpop.f32.mrb[0].mxu0
    %1502 = vmatprep.mubr.bf16.mxu0 0
    %1503 = vmatmul.mubr.bf16.gmra.mrb[0].mxu0 %v1043
    %v1504 = vpop.f32.mrb[0].mxu0
    %v1505 = vadd.f32 %v1344, %v1504
    %v1506 = vpop.f32.mrb[0].mxu0
    %v1507 = vpop.f32.mrb[0].mxu0
    %v1508 = vadd.f32 %v1347, %v1507
    %v1509 = vpop.f32.mrb[0].mxu0
    %1510 = vmatprep.mubr.bf16.mxu0 0
    %1511 = vmatmul.mubr.bf16.gmra.mrb[0].mxu0 %v1044
    %v1512 = vpop.f32.mrb[0].mxu0
    %v1513 = vadd.f32 %v1352, %v1512
    %v1514 = vpop.f32.mrb[0].mxu0
    %v1515 = vpop.f32.mrb[0].mxu0
    %v1516 = vadd.f32 %v1355, %v1515
    %v1517 = vpop.f32.mrb[0].mxu0
    %1518 = vmatprep.mubr.bf16.mxu0 0
    %1519 = vmatmul.mubr.bf16.gmra.mrb[0].mxu0 %v1045
    %v1520 = vpop.f32.mrb[0].mxu0
    %v1521 = vadd.f32 %v1360, %v1520
    %v1522 = vpop.f32.mrb[0].mxu0
    %v1523 = vpop.f32.mrb[0].mxu0
    %v1524 = vadd.f32 %v1363, %v1523
    %v1525 = vpop.f32.mrb[0].mxu0
    %1526 = vmatprep.mubr.bf16.mxu0 0
    %1527 = vmatmul.mubr.bf16.gmra.mrb[0].mxu0 %v1062
    %v1528 = vpop.f32.mrb[0].mxu0
    %v1529 = vadd.f32 %v1368, %v1528
    %v1530 = vpop.f32.mrb[0].mxu0
    %v1531 = vpop.f32.mrb[0].mxu0
    %v1532 = vadd.f32 %v1371, %v1531
    %v1533 = vpop.f32.mrb[0].mxu0
    %1534 = vmatprep.mubr.bf16.mxu0 0
    %1535 = vmatmul.mubr.bf16.gmra.mrb[0].mxu0 %v1063
    %v1536 = vpop.f32.mrb[0].mxu0
    %v1537 = vadd.f32 %v1376, %v1536
    %v1538 = vpop.f32.mrb[0].mxu0
    %v1539 = vpop.f32.mrb[0].mxu0
    %v1540 = vadd.f32 %v1379, %v1539
    %v1541 = vpop.f32.mrb[0].mxu0
    %1542 = vmatprep.mubr.bf16.mxu0 0
    %1543 = vmatmul.mubr.bf16.gmra.mrb[0].mxu0 %v1064
    %v1544 = vpop.f32.mrb[0].mxu0
    %v1545 = vadd.f32 %v1384, %v1544
    %v1546 = vpop.f32.mrb[0].mxu0
    %v1547 = vpop.f32.mrb[0].mxu0
    %v1548 = vadd.f32 %v1387, %v1547
    %v1549 = vpop.f32.mrb[0].mxu0
    %1550 = vmatprep.mubr.bf16.mxu0 0
    %1551 = vmatmul.mubr.bf16.gmra.mrb[0].mxu0 %v1065
    %v1552 = vpop.f32.mrb[0].mxu0
    %v1553 = vadd.f32 %v1392, %v1552
    %v1554 = vpop.f32.mrb[0].mxu0
    %v1555 = vpop.f32.mrb[0].mxu0
    %v1556 = vadd.f32 %v1395, %v1555
    %v1557 = vpop.f32.mrb[0].mxu0
    %1558 = vmatprep.mubr.bf16.mxu0 0
    %1559 = vmatmul.mubr.bf16.gmra.mrb[0].mxu0 %v1066
    %v1560 = vpop.f32.mrb[0].mxu0
    %v1561 = vadd.f32 %v1400, %v1560
    %v1562 = vpop.f32.mrb[0].mxu0
    %v1563 = vpop.f32.mrb[0].mxu0
    %v1564 = vadd.f32 %v1403, %v1563
    %v1565 = vpop.f32.mrb[0].mxu0
    %1566 = vmatprep.mubr.bf16.mxu0 0
    %1567 = vmatmul.mubr.bf16.gmra.mrb[0].mxu0 %v1067
    %v1568 = vpop.f32.mrb[0].mxu0
    %v1569 = vadd.f32 %v1408, %v1568
    %v1570 = vpop.f32.mrb[0].mxu0
    %v1571 = vpop.f32.mrb[0].mxu0
    %v1572 = vadd.f32 %v1411, %v1571
    %v1573 = vpop.f32.mrb[0].mxu0
    %1574 = vmatprep.mubr.bf16.mxu0 0
    %1575 = vmatmul.mubr.bf16.gmra.mrb[0].mxu0 %v1068
    %v1576 = vpop.f32.mrb[0].mxu0
    %v1577 = vadd.f32 %v1416, %v1576
    %v1578 = vpop.f32.mrb[0].mxu0
    %v1579 = vpop.f32.mrb[0].mxu0
    %v1580 = vadd.f32 %v1419, %v1579
    %v1581 = vpop.f32.mrb[0].mxu0
    %1582 = vmatprep.mubr.bf16.mxu0 0
    %1583 = vmatmul.mubr.bf16.gmra.mrb[0].mxu0 %v1069
    %v1584 = vpop.f32.mrb[0].mxu0
    %v1585 = vadd.f32 %v1424, %v1584
    %v1586 = vpop.f32.mrb[0].mxu0
    %v1587 = vpop.f32.mrb[0].mxu0
    %v1588 = vadd.f32 %v1427, %v1587
    %v1589 = vpop.f32.mrb[0].mxu0
    %1590 = vdwg.mxu0
    %1591 = vst [vmem:[#allocation8] sm:$0xff] %v1465
    %1592 = vst [vmem:[#allocation8 + $0x8] sm:$0xff] %v1468
    %1593 = vst [vmem:[#allocation8 + $0x10] sm:$0xff] %v1473
    %1594 = vst [vmem:[#allocation8 + $0x18] sm:$0xff] %v1476
    %1595 = vst [vmem:[#allocation8 + $0x20] sm:$0xff] %v1481
    %1596 = vst [vmem:[#allocation8 + $0x28] sm:$0xff] %v1484
    %1597 = vst [vmem:[#allocation8 + $0x30] sm:$0xff] %v1489
    %1598 = vst [vmem:[#allocation8 + $0x38] sm:$0xff] %v1492
    %1599 = vst [vmem:[#allocation8 + $0x40] sm:$0xff] %v1497
    %1600 = vst [vmem:[#allocation8 + $0x48] sm:$0xff] %v1500
    %1601 = vst [vmem:[#allocation8 + $0x50] sm:$0xff] %v1505
    %1602 = vst [vmem:[#allocation8 + $0x58] sm:$0xff] %v1508
    %1603 = vst [vmem:[#allocation8 + $0x60] sm:$0xff] %v1513
    %1604 = vst [vmem:[#allocation8 + $0x68] sm:$0xff] %v1516
    %1605 = vst [vmem:[#allocation8 + $0x70] sm:$0xff] %v1521
    %1606 = vst [vmem:[#allocation8 + $0x78] sm:$0xff] %v1524
    %1607 = vst [vmem:[#allocation8 + $0x80] sm:$0xff] %v1529
    %1608 = vst [vmem:[#allocation8 + $0x88] sm:$0xff] %v1532
    %1609 = vst [vmem:[#allocation8 + $0x90] sm:$0xff] %v1537
    %1610 = vst [vmem:[#allocation8 + $0x98] sm:$0xff] %v1540
    %1611 = vst [vmem:[#allocation8 + $0xa0] sm:$0xff] %v1545
    %1612 = vst [vmem:[#allocation8 + $0xa8] sm:$0xff] %v1548
    %1613 = vst [vmem:[#allocation8 + $0xb0] sm:$0xff] %v1553
    %1614 = vst [vmem:[#allocation8 + $0xb8] sm:$0xff] %v1556
    %1615 = vst [vmem:[#allocation8 + $0xc0] sm:$0xff] %v1561
    %1616 = vst [vmem:[#allocation8 + $0xc8] sm:$0xff] %v1564
    %1617 = vst [vmem:[#allocation8 + $0xd0] sm:$0xff] %v1569
    %1618 = vst [vmem:[#allocation8 + $0xd8] sm:$0xff] %v1572
    %1619 = vst [vmem:[#allocation8 + $0xe0] sm:$0xff] %v1577
    %1620 = vst [vmem:[#allocation8 + $0xe8] sm:$0xff] %v1580
    %1621 = vst [vmem:[#allocation8 + $0xf0] sm:$0xff] %v1585
    %1622 = vst [vmem:[#allocation8 + $0xf8] sm:$0xff] %v1588
    // Predicated region
    $region30: #{tpu_custom_call.1} parent=1 // pred_check
      _
    $region31: #{tpu_custom_call.1} parent=1 // pred_check_branch
      %1624 = sbr.rel (0) target = $region33
    $region32: #{tpu_custom_call.1} parent=1 // pred_region
      %s1626 = ssub.s32 4096, 4096
      %1627 = vsyncadd [#allocation4], %s1626
      %s1628 = sshll.u32 [#allocation8], 4
      %s1629 = int_to_ptr.vmem [resolvable:$true] %s1628
      %1634 = dma.vmem_to_hbm [thread:$0]  %s1629, 4096, %s4, [#allocation4], 128, 128, 8
    $region33: #{tpu_custom_call.1} parent=1 // pred_fallthru
      _
    // Predicated region
    $region34: #{tpu_custom_call.1} parent=1 // pred_check
      _
    $region35: #{tpu_custom_call.1} parent=1 // pred_check_branch
      %1636 = sbr.rel (0) target = $region37
    $region36: #{tpu_custom_call.1} parent=1 // pred_region
      %1637 = dma.done [#allocation4], 4096
    $region37: #{tpu_custom_call.1} parent=1 // pred_fallthru
      _
    %1638 = vsyncpa [#allocation3], 1
    %1639 = vsyncpa [#allocation6], 1
    %1640 = vsyncpa [#allocation4], 1

</llo_original>
